<compile_context>
chip_gen: v6e
topology: v6e:2x2x1
jax: 0.10.0
libtpu: 0.0.40
codegen_flags: <defaults>
</compile_context>

<pallas_src>
import functools

import jax
import jax.numpy as jnp
from jax.experimental import pallas as pl
from jax.experimental.pallas import tpu as pltpu

_MASK_NONE = "none"
_MASK_CAUSAL = "causal"
_MASK_BIAS = "bias"


def _sdpa_kernel(q_ref, k_ref, v_ref, *refs, scale, mask_mode, tq):
    # q_ref:    (1, TQ, Dk)   one query tile of one (batch, head)
    # k_ref:    (1, L,  Dk)   full keys for the head
    # v_ref:    (1, L,  Dv)   full values for the head
    # bias_ref: (1, TQ, L)    only in _MASK_BIAS mode (0 keep / -1e9 masked), bf16
    if mask_mode == _MASK_BIAS:
        bias_ref, o_ref, attn_ref = refs
    else:
        o_ref, attn_ref = refs

    q = q_ref[0] * scale          # fold 1/sqrt(dk) into the small (TQ, Dk) tile
    k = k_ref[0]
    v = v_ref[0]

    # scores[i, j] = sum_d q[i, d] * k[j, d]  (q @ k^T without a K relayout).
    # MXU is fed in the compute dtype (bf16 by default); accumulate in f32.
    scores = jax.lax.dot_general(
        q, k,
        dimension_numbers=(((1,), (1,)), ((), ())),
        preferred_element_type=jnp.float32,
    )                              # [TQ, L] f32

    if mask_mode == _MASK_CAUSAL:
        # Structured mask generated in-kernel: no L x L bias stream from HBM.
        q_start = pl.program_id(1) * tq
        row = jax.lax.broadcasted_iota(jnp.int32, scores.shape, 0) + q_start
        col = jax.lax.broadcasted_iota(jnp.int32, scores.shape, 1)
        scores = jnp.where(col > row, -1000000000.0, scores)  # == masked_fill
    elif mask_mode == _MASK_BIAS:
        scores = scores + bias_ref[0].astype(jnp.float32)

    # Numerically stable softmax over keys; all elementwise math in f32.
    m = jnp.max(scores, axis=-1, keepdims=True)
    e = jnp.exp(scores - m)
    denom = jnp.sum(e, axis=-1, keepdims=True)
    # attn is a module output: use exact division (not approx reciprocal) so
    # rows sum to 1 to f32 accuracy.
    attn = e / denom               # [TQ, L] f32

    # output = attn @ v; feed the MXU in v's dtype, accumulate in f32.
    out = jnp.dot(attn.astype(v.dtype), v, preferred_element_type=jnp.float32)

    o_ref[0] = out.astype(o_ref.dtype)
    attn_ref[0] = attn.astype(attn_ref.dtype)


def _vmem_estimate_bytes(tq, L, Dk, Dv, c_bytes, out_bytes, attn_bytes,
                         has_bias, kv_buffers):
    kv = kv_buffers * L * (Dk + Dv) * c_bytes          # full-head K + V buffers
    q_t = 2 * tq * Dk * c_bytes                        # q tile, double-buffered
    bias_t = (2 * tq * L * 2) if has_bias else 0       # bf16 bias tile
    o_t = 2 * tq * Dv * out_bytes
    a_t = 2 * tq * L * attn_bytes
    interm = 4 * tq * L * 4                            # f32 scores/e/attn slack
    return kv + q_t + bias_t + o_t + a_t + interm


def _pick_q_tile(L, Dk, Dv, c_bytes, out_bytes, attn_bytes, has_bias,
                 kv_buffers, budget_bytes=40 << 20):
    # Prefer the biggest sublane-aligned tile whose estimated footprint fits a
    # conservative budget (amortizes per-grid-step overhead, hides head-switch
    # K/V DMA); fall back to one full-L tile for odd L.
    cands = [c for c in (256, 128, 64, 32, 16, 8) if L % c == 0]
    if not cands:
        return L
    for c in cands:
        if _vmem_estimate_bytes(c, L, Dk, Dv, c_bytes, out_bytes, attn_bytes,
                                has_bias, kv_buffers) <= budget_bytes:
            return c
    return cands[-1]


def _kv_block_spec(shape, index_map, buffers):
    # K/V block index only changes at head boundaries; deeper buffering lets
    # the next head's multi-tile K+V DMA start more q-tile steps ahead.
    if buffers and buffers != 2 and hasattr(pl, "Buffered"):
        try:
            return pl.BlockSpec(shape, index_map,
                                pipeline_mode=pl.Buffered(buffers))
        except TypeError:          # build without pipeline_mode support
            pass
    return pl.BlockSpec(shape, index_map)


def scaled_dot_product_attention(q, k, v, attn_mask=None, *, causal=False,
                                 tq=None, compute_dtype=jnp.bfloat16,
                                 out_dtype=None, attn_dtype=None,
                                 kv_buffers=3):
    """q, k: [B, H, L, Dk]; v: [B, H, L, Dv].

    attn_mask: boolean, broadcastable to [B, H, L, L] (True = masked), or None.
    causal=True applies an upper-triangular mask generated in-kernel (and
    ignores attn_mask).  Returns (output [B, H, L, Dv], attn [B, H, L, L]),
    matching the PyTorch module with dropout in eval mode (identity).

    compute_dtype: dtype fed to the MXU / streamed from HBM (bf16 default for
    throughput & bandwidth; pass jnp.float32 for full precision).
    """
    B, H, L, Dk = q.shape
    Dv = v.shape[-1]
    BH = B * H

    if compute_dtype is None:
        compute_dtype = q.dtype
    if out_dtype is None:
        out_dtype = q.dtype
    if attn_dtype is None:
        attn_dtype = compute_dtype

    c_bytes = jnp.dtype(compute_dtype).itemsize
    out_bytes = jnp.dtype(out_dtype).itemsize
    attn_bytes = jnp.dtype(attn_dtype).itemsize

    if causal:
        mask_mode = _MASK_CAUSAL
    elif attn_mask is None:
        mask_mode = _MASK_NONE
    else:
        mask_mode = _MASK_BIAS

    qf = q.reshape(BH, L, Dk).astype(compute_dtype)
    kf = k.reshape(BH, L, Dk).astype(compute_dtype)
    vf = v.reshape(BH, L, Dv).astype(compute_dtype)

    # Keep the output head dim lane-dense (multiple of 128): zero-pad V if not.
    Dv_p = -(-Dv // 128) * 128
    if Dv_p != Dv:
        vf = jnp.pad(vf, ((0, 0), (0, 0), (0, Dv_p - Dv)))

    if tq is None:
        tq = _pick_q_tile(L, Dk, Dv_p, c_bytes, out_bytes, attn_bytes,
                          mask_mode == _MASK_BIAS, kv_buffers)
    assert L % tq == 0, f"L={L} must be divisible by tq={tq}"
    n_q_tiles = L // tq

    # Additive mask bias (general-mask path only), bf16, kept at its broadcast
    # shape over (B, H) so the same HBM tile is reused by every head possible.
    bias = None
    head_index = lambda i: 0
    if mask_mode == _MASK_BIAS:
        mask = jnp.asarray(attn_mask)
        if mask.ndim == 2:
            mask = mask[None, None]
        elif mask.ndim == 3:
            mask = mask[:, None]
        mb, mh = mask.shape[0], mask.shape[1]
        bias4 = jnp.where(mask, -1000000000.0, 0.0).astype(jnp.bfloat16)
        if (mb, mh) == (1, 1):
            bias = bias4.reshape(1, L, L)
            head_index = lambda i: 0
        elif (mb, mh) == (B, 1):
            bias = bias4.reshape(B, L, L)
            head_index = lambda i: i // H
        elif (mb, mh) == (B, H):
            bias = bias4.reshape(BH, L, L)
            head_index = lambda i: i
        else:
            bias = jnp.broadcast_to(bias4, (B, H, L, L)).reshape(BH, L, L)
            head_index = lambda i: i

    scale = 1.0 / (Dk ** 0.5)
    kernel = functools.partial(_sdpa_kernel, scale=scale, mask_mode=mask_mode,
                               tq=tq)

    est = _vmem_estimate_bytes(tq, L, Dk, Dv_p, c_bytes, out_bytes, attn_bytes,
                               mask_mode == _MASK_BIAS, kv_buffers)
    # Explicit scoped-VMEM limit with headroom; stay under v7x's 64 MiB.
    vmem_limit = min(56 << 20, max(32 << 20, int(1.5 * est) + (4 << 20)))

    def _call(kv_bufs):
        in_specs = [
            pl.BlockSpec((1, tq, Dk), lambda i, j: (i, j, 0)),              # q
            _kv_block_spec((1, L, Dk), lambda i, j: (i, 0, 0), kv_bufs),    # K
            _kv_block_spec((1, L, Dv_p), lambda i, j: (i, 0, 0), kv_bufs),  # V
        ]
        inputs = [qf, kf, vf]
        if mask_mode == _MASK_BIAS:
            in_specs.append(
                pl.BlockSpec((1, tq, L), lambda i, j: (head_index(i), j, 0)))
            inputs.append(bias)
        return pl.pallas_call(
            kernel,
            out_shape=(
                jax.ShapeDtypeStruct((BH, L, Dv_p), out_dtype),
                jax.ShapeDtypeStruct((BH, L, L), attn_dtype),
            ),
            grid_spec=pltpu.PrefetchScalarGridSpec(
                num_scalar_prefetch=0,
                grid=(BH, n_q_tiles),
                in_specs=in_specs,
                out_specs=[
                    pl.BlockSpec((1, tq, Dv_p), lambda i, j: (i, j, 0)),
                    pl.BlockSpec((1, tq, L), lambda i, j: (i, j, 0)),
                ],
            ),
            compiler_params=pltpu.CompilerParams(
                # Shard the head axis across cores (each core fetches its own
                # heads' K/V once); the q-tile axis stays sequential.
                dimension_semantics=("parallel", "arbitrary"),
                vmem_limit_bytes=vmem_limit,
            ),
        )(*inputs)

    try:
        out_f, attn_f = _call(kv_buffers)
    except Exception:
        if kv_buffers == 2:
            raise
        # Fall back to the default double-buffered K/V pipeline.
        out_f, attn_f = _call(2)

    if Dv_p != Dv:
        out_f = out_f[..., :Dv]
    return out_f.reshape(B, H, L, Dv), attn_f.reshape(B, H, L, L)


def _reference(q, k, v, attn_mask=None):
    dk = k.shape[-1]
    scores = jnp.einsum("bhld,bhmd->bhlm", q, k) / (dk ** 0.5)
    if attn_mask is not None:
        scores = jnp.where(attn_mask, -1000000000.0, scores)
    attn = jax.nn.softmax(scores, axis=-1)
    out = jnp.einsum("bhlm,bhmd->bhld", attn, v)
    return out, attn


if __name__ == "__main__":
    B, H, L, Dk, Dv = 2, 4, 256, 64, 128
    key = jax.random.PRNGKey(0)
    key_q, key_k, key_v = jax.random.split(key, 3)

    q = jax.random.normal(key_q, (B, H, L, Dk), dtype=jnp.float32)
    k = jax.random.normal(key_k, (B, H, L, Dk), dtype=jnp.float32)
    v = jax.random.normal(key_v, (B, H, L, Dv), dtype=jnp.float32)
    causal_mask = jnp.triu(jnp.ones((L, L), dtype=bool), k=1)  # True = masked

    ref_out_m, ref_attn_m = _reference(q, k, v, causal_mask)
    ref_out_n, ref_attn_n = _reference(q, k, v, None)

    # 1) Structured (causal) mask generated in-kernel: zero mask DMA.
    out_c, attn_c = scaled_dot_product_attention(q, k, v, causal=True)
    jax.block_until_ready((out_c, attn_c))
    assert out_c.shape == (B, H, L, Dv) and attn_c.shape == (B, H, L, L)
    # bf16 MXU feeds + bf16 attn writeback => relaxed tolerance vs f32 reference.
    assert jnp.allclose(out_c.astype(jnp.float32), ref_out_m, atol=2e-2, rtol=2e-2)
    assert jnp.allclose(attn_c.astype(jnp.float32), ref_attn_m, atol=2e-2, rtol=2e-2)

    # 2) Arbitrary boolean mask streamed as a shared (1, L, L) bf16 bias.
    out_m, attn_m = scaled_dot_product_attention(q, k, v, causal_mask)
    jax.block_until_ready((out_m, attn_m))
    assert jnp.allclose(out_m.astype(jnp.float32), ref_out_m, atol=2e-2, rtol=2e-2)
    assert jnp.allclose(attn_m.astype(jnp.float32), ref_attn_m, atol=2e-2, rtol=2e-2)

    # 3) No-mask specialization: no bias input, no bias add.
    out_n, attn_n = scaled_dot_product_attention(q, k, v, None)
    jax.block_until_ready((out_n, attn_n))
    assert jnp.allclose(out_n.astype(jnp.float32), ref_out_n, atol=2e-2, rtol=2e-2)
    assert jnp.allclose(attn_n.astype(jnp.float32), ref_attn_n, atol=2e-2, rtol=2e-2)

    # 4) Full-precision path (matches the torch forward numerics tightly).
    out_p, attn_p = scaled_dot_product_attention(
        q, k, v, causal_mask, compute_dtype=jnp.float32)
    jax.block_until_ready((out_p, attn_p))
    assert jnp.allclose(out_p, ref_out_m, atol=2e-3, rtol=2e-3)
    assert jnp.allclose(attn_p, ref_attn_m, atol=2e-3, rtol=2e-3)

    print("KERNEL_OK")
</pallas_src>

<mosaic_0001>
module attributes {stable_mosaic.version = 11 : i64} {
  func.func @_sdpa_kernel(%arg0: i32, %arg1: i32, %arg2: memref<1x256x64xbf16, #tpu.memory_space<vmem>>, %arg3: memref<1x256x64xbf16, #tpu.memory_space<vmem>>, %arg4: memref<1x256x128xbf16, #tpu.memory_space<vmem>>, %arg5: memref<1x256x128xf32, #tpu.memory_space<vmem>>, %arg6: memref<1x256x256xbf16, #tpu.memory_space<vmem>>) attributes {dimension_semantics = [#tpu.dimension_semantics<parallel>, #tpu.dimension_semantics<arbitrary>], iteration_bounds = array<i64: 8, 1>, scalar_prefetch = 0 : i64, scratch_operands = 0 : i64, tpu.core_type = #tpu.core_type<tc>, window_params = [{transform_indices = @transform_0, window_bounds = array<i64: 1, 256, 64>}, {transform_indices = @transform_1, window_bounds = array<i64: 1, 256, 64>}, {transform_indices = @transform_2, window_bounds = array<i64: 1, 256, 128>}, {transform_indices = @transform_3, window_bounds = array<i64: 1, 256, 128>}, {transform_indices = @transform_4, window_bounds = array<i64: 1, 256, 256>}]} {
    %c0 = arith.constant 0 : index
    %c0_0 = arith.constant 0 : index
    %c0_1 = arith.constant 0 : index
    %0 = vector.load %arg2[%c0, %c0_0, %c0_1] : memref<1x256x64xbf16, #tpu.memory_space<vmem>>, vector<1x256x64xbf16>
    %1 = vector.shape_cast %0 : vector<1x256x64xbf16> to vector<256x64xbf16>
    %cst = arith.constant 1.250000e-01 : bf16
    %2 = vector.broadcast %cst : bf16 to vector<256x64xbf16>
    %3 = arith.mulf %1, %2 : vector<256x64xbf16>
    %c0_2 = arith.constant 0 : index
    %c0_3 = arith.constant 0 : index
    %c0_4 = arith.constant 0 : index
    %4 = vector.load %arg3[%c0_2, %c0_3, %c0_4] : memref<1x256x64xbf16, #tpu.memory_space<vmem>>, vector<1x256x64xbf16>
    %5 = vector.shape_cast %4 : vector<1x256x64xbf16> to vector<256x64xbf16>
    %c0_5 = arith.constant 0 : index
    %c0_6 = arith.constant 0 : index
    %c0_7 = arith.constant 0 : index
    %6 = vector.load %arg4[%c0_5, %c0_6, %c0_7] : memref<1x256x128xbf16, #tpu.memory_space<vmem>>, vector<1x256x128xbf16>
    %7 = vector.shape_cast %6 : vector<1x256x128xbf16> to vector<256x128xbf16>
    %cst_8 = arith.constant dense<0.000000e+00> : vector<256x256xf32>
    %8 = tpu.matmul %3, %5, %cst_8 {dimension_numbers = #tpu.dot_dimension_numbers<[1], [1], [0], [0], [0, 0, 1, 0], [], []>} : vector<256x64xbf16>, vector<256x64xbf16>, vector<256x256xf32> -> vector<256x256xf32>
    %c256_i32 = arith.constant 256 : i32
    %9 = arith.muli %arg1, %c256_i32 : i32
    %10 = tpu.iota {dimensions = array<i32: 0>} : vector<256x256xi32>
    %11 = vector.broadcast %9 : i32 to vector<256x256xi32>
    %12 = arith.addi %10, %11 : vector<256x256xi32>
    %13 = tpu.iota {dimensions = array<i32: 1>} : vector<256x256xi32>
    %14 = arith.cmpi sgt, %13, %12 : vector<256x256xi32>
    %cst_9 = arith.constant -1.000000e+09 : f32
    %15 = vector.broadcast %cst_9 : f32 to vector<256x256xf32>
    %16 = arith.select %14, %15, %8 : vector<256x256xi1>, vector<256x256xf32>
    %cst_10 = arith.constant dense<0xFF800000> : vector<256xf32>
    %17 = vector.multi_reduction <maximumf>, %16, %cst_10 [1] : vector<256x256xf32> to vector<256xf32>
    %18 = vector.shape_cast %17 : vector<256xf32> to vector<256x1xf32>
    %19 = vector.broadcast %18 : vector<256x1xf32> to vector<256x256xf32>
    %20 = arith.subf %16, %19 : vector<256x256xf32>
    %21 = math.exp %20 : vector<256x256xf32>
    %cst_11 = arith.constant dense<0.000000e+00> : vector<256xf32>
    %22 = vector.multi_reduction <add>, %21, %cst_11 [1] : vector<256x256xf32> to vector<256xf32>
    %23 = vector.shape_cast %22 : vector<256xf32> to vector<256x1xf32>
    %24 = vector.broadcast %23 : vector<256x1xf32> to vector<256x256xf32>
    %25 = arith.divf %21, %24 : vector<256x256xf32>
    %26 = arith.truncf %25 : vector<256x256xf32> to vector<256x256xbf16>
    %cst_12 = arith.constant dense<0.000000e+00> : vector<256x128xf32>
    %27 = tpu.matmul %26, %7, %cst_12 {dimension_numbers = #tpu.dot_dimension_numbers<[1], [0], [0], [1], [0, 0, 1, 1], [], []>} : vector<256x256xbf16>, vector<256x128xbf16>, vector<256x128xf32> -> vector<256x128xf32>
    %c0_13 = arith.constant 0 : index
    %c0_14 = arith.constant 0 : index
    %c0_15 = arith.constant 0 : index
    %28 = vector.load %arg5[%c0_13, %c0_14, %c0_15] : memref<1x256x128xf32, #tpu.memory_space<vmem>>, vector<1x256x128xf32>
    %29 = vector.shape_cast %28 : vector<1x256x128xf32> to vector<256x128xf32>
    %30 = vector.shape_cast %27 : vector<256x128xf32> to vector<1x256x128xf32>
    tpu.vector_store %arg5[%c0_13, %c0_14, %c0_15], %30 {strides = array<i32>} : memref<1x256x128xf32, #tpu.memory_space<vmem>>, vector<1x256x128xf32>,
    %31 = arith.truncf %25 : vector<256x256xf32> to vector<256x256xbf16>
    %c0_16 = arith.constant 0 : index
    %c0_17 = arith.constant 0 : index
    %c0_18 = arith.constant 0 : index
    %32 = vector.load %arg6[%c0_16, %c0_17, %c0_18] : memref<1x256x256xbf16, #tpu.memory_space<vmem>>, vector<1x256x256xbf16>
    %33 = vector.shape_cast %32 : vector<1x256x256xbf16> to vector<256x256xbf16>
    %34 = vector.shape_cast %31 : vector<256x256xbf16> to vector<1x256x256xbf16>
    tpu.vector_store %arg6[%c0_16, %c0_17, %c0_18], %34 {strides = array<i32>} : memref<1x256x256xbf16, #tpu.memory_space<vmem>>, vector<1x256x256xbf16>,
    return
  }
  func.func @transform_0(%arg0: i32, %arg1: i32) -> (i32, i32, i32) {
    %c0_i32 = arith.constant 0 : i32
    %c0_i32_0 = arith.constant 0 : i32
    return %arg0, %arg1, %c0_i32 : i32, i32, i32
  }
  func.func @transform_1(%arg0: i32, %arg1: i32) -> (i32, i32, i32) {
    %c0_i32 = arith.constant 0 : i32
    %c0_i32_0 = arith.constant 0 : i32
    %c0_i32_1 = arith.constant 0 : i32
    return %arg0, %c0_i32, %c0_i32_0 : i32, i32, i32
  }
  func.func @transform_2(%arg0: i32, %arg1: i32) -> (i32, i32, i32) {
    %c0_i32 = arith.constant 0 : i32
    %c0_i32_0 = arith.constant 0 : i32
    %c0_i32_1 = arith.constant 0 : i32
    return %arg0, %c0_i32, %c0_i32_0 : i32, i32, i32
  }
  func.func @transform_3(%arg0: i32, %arg1: i32) -> (i32, i32, i32) {
    %c0_i32 = arith.constant 0 : i32
    %c0_i32_0 = arith.constant 0 : i32
    return %arg0, %arg1, %c0_i32 : i32, i32, i32
  }
  func.func @transform_4(%arg0: i32, %arg1: i32) -> (i32, i32, i32) {
    %c0_i32 = arith.constant 0 : i32
    %c0_i32_0 = arith.constant 0 : i32
    return %arg0, %arg1, %c0_i32 : i32, i32, i32
  }
}

</mosaic_0001>

<llo_original>
// kernel: tpu_custom_call.1
$region0: #{tpu_custom_call.1}
  #allocation0 [shape = 'u32[]', space=smem, size = 0x4, offset = 0x4, fixed_abs, tag = 'smem constant byte address 0x4 - core index']
  #allocation1 [shape = 'u32[144,128]{1,0:T(1,128)}', space=vmem, size = 0x12000, scoped, tag = 'internal scratch']
  %s0 = inlined_call_operand.vmem [shape: bf16[8,256,64], index: 0, kind: input, shape index: {}]
  %s1 = inlined_call_operand.vmem [shape: bf16[8,256,64], index: 1, kind: input, shape index: {}]
  %s2 = inlined_call_operand.vmem [shape: bf16[8,256,128], index: 2, kind: input, shape index: {}]
  %s3 = inlined_call_operand.hbm [shape: f32[8,256,128], index: 3, kind: output, shape index: {0}]
  %s4 = inlined_call_operand.hbm [shape: bf16[8,256,256], index: 4, kind: output, shape index: {1}]
  %5 = xla_tuple %s3, %s4
  %s6 = sld [smem:[#allocation0]]
  $region53: #{tpu_custom_call.1} parent=0
    _
  %s8 = ssub.s32 1, %s6
  %s9 = scalar_select 0, %s8, %s6
  $region1: #{tpu_custom_call.1} parent=0
    #allocation2 [shape = 'u8[262144]{0}', space=vmem, size = 0x40000, scoped, tag = 'output window, operand 0']
    #allocation3 [shape = 's32[2]{0}', space=sflag, size = 0x8, scoped, tag = 'scoped memory for tpu_custom_call.1']
    #allocation4 [shape = 'u8[262144]{0}', space=vmem, size = 0x40000, scoped, tag = 'output window, operand 1']
    #allocation5 [shape = 's32[2]{0}', space=sflag, size = 0x8, scoped, tag = 'scoped memory for tpu_custom_call.1']
    %10 = vsyncpa [#allocation3], 0
    %s11 = scalar_lea.sflag [#allocation3], 1
    %12 = vsyncpa %s11, 0
    %13 = vsyncpa [#allocation5], 0
    %s14 = scalar_lea.sflag [#allocation5], 1
    %15 = vsyncpa %s14, 0
    loop: start=0, step=1, limit=10
    $region2: #{tpu_custom_call.1} parent=1 // loop_pre_header
      _
    $region3: #{tpu_custom_call.1} parent=1 // loop_header
      %s17 = sphi 0, %s21
      %p18 = scmp.ge.s32.totalorder %s17, 10
      %s24 = sphi 0, %s36
      %s25 = sphi 0, %s32
      %s26 = sphi 0, %s24
      %s27 = sphi 0, %s25
      %s28 = sphi 0, %s26
      %s29 = sphi 0, %s27
      %s41 = sphi 0, %s43
      %s44 = sphi 0, %s41
      %s45 = sphi 0, %s44
      %s61 = sphi 0, %s45
      %s67 = sphi 0, %s69
      %s70 = sphi 0, %s67
      %s71 = sphi 0, %s70
      %s87 = sphi 0, %s71
      %s93 = sphi 0, %s95
      %s96 = sphi 0, %s93
      %s97 = sphi 0, %s96
      %s113 = sphi 0, %s97
      %s121 = sphi 0, %s123
      %s124 = sphi 0, %s121
      %s125 = sphi 0, %s124
      %s141 = sphi 0, %s125
      %s149 = sphi 0, %s151
      %s152 = sphi 0, %s149
      %s153 = sphi 0, %s152
      %s169 = sphi 0, %s153
    $region4: #{tpu_custom_call.1} parent=1 // loop_header_branch
      %20 = sbr.rel (%p18) target = $region8
    $region5: #{tpu_custom_call.1} parent=1 // loop_body
      %s22 = ssub.s32 %s17, 1
      %s23 = ssub.s32 %s17, 2
      %s30 = sadd.s32 1, %s25
      %p31 = scmp.ge.s32.totalorder %s30, 1
      %s32 = scalar_select %p31, 0, %s30
      %s33 = sadd.s32 1, %s24
      %s34 = scalar_select %p31, %s33, %s24
      %p35 = scmp.ge.s32.totalorder %s34, 8
      %s36 = scalar_select %p35, 0, %s34
      %s37 = ssub.s32 %s24, %s36
      %s38 = ssub.s32 %s25, %s32
      %s39 = sor.u32 %s37, %s38
      %p40 = scmp.eq.s32.totalorder %s39, 0
      %s42 = sadd.s32 %s41, 1
      %s43 = scalar_select %p40, %s41, %s42
      %p46 = pneg %p40
      %p47 = scmp.eq.s32.totalorder %s17, 7
      %p48 = por %p46, %p47
      %p49 = scmp.ne.s32.totalorder %s41, %s44
      %p50 = scmp.eq.s32.totalorder %s17, 0
      %p51 = por %p49, %p50
      %p52 = scmp.ne.s32.totalorder %s41, %s44
      %p53 = scmp.eq.s32.totalorder %s22, 7
      %p54 = por %p52, %p53
      %p55 = scmp.ne.s32.totalorder %s44, %s45
      %p56 = scmp.eq.s32.totalorder %s22, 0
      %p57 = por %p55, %p56
      %p58 = scmp.ne.s32.totalorder %s44, %s45
      %p59 = scmp.eq.s32.totalorder %s23, 7
      %p60 = por %p58, %p59
      %p62 = scmp.ne.s32.totalorder %s45, %s61
      %p63 = scmp.eq.s32.totalorder %s23, 0
      %p64 = por %p62, %p63
      %s65 = ssub.s32 %s24, %s36
      %p66 = scmp.eq.s32.totalorder %s65, 0
      %s68 = sadd.s32 %s67, 1
      %s69 = scalar_select %p66, %s67, %s68
      %p72 = pneg %p66
      %p73 = scmp.eq.s32.totalorder %s17, 7
      %p74 = por %p72, %p73
      %p75 = scmp.ne.s32.totalorder %s67, %s70
      %p76 = scmp.eq.s32.totalorder %s17, 0
      %p77 = por %p75, %p76
      %p78 = scmp.ne.s32.totalorder %s67, %s70
      %p79 = scmp.eq.s32.totalorder %s22, 7
      %p80 = por %p78, %p79
      %p81 = scmp.ne.s32.totalorder %s70, %s71
      %p82 = scmp.eq.s32.totalorder %s22, 0
      %p83 = por %p81, %p82
      %p84 = scmp.ne.s32.totalorder %s70, %s71
      %p85 = scmp.eq.s32.totalorder %s23, 7
      %p86 = por %p84, %p85
      %p88 = scmp.ne.s32.totalorder %s71, %s87
      %p89 = scmp.eq.s32.totalorder %s23, 0
      %p90 = por %p88, %p89
      %s91 = ssub.s32 %s24, %s36
      %p92 = scmp.eq.s32.totalorder %s91, 0
      %s94 = sadd.s32 %s93, 1
      %s95 = scalar_select %p92, %s93, %s94
      %p98 = pneg %p92
      %p99 = scmp.eq.s32.totalorder %s17, 7
      %p100 = por %p98, %p99
      %p101 = scmp.ne.s32.totalorder %s93, %s96
      %p102 = scmp.eq.s32.totalorder %s17, 0
      %p103 = por %p101, %p102
      %p104 = scmp.ne.s32.totalorder %s93, %s96
      %p105 = scmp.eq.s32.totalorder %s22, 7
      %p106 = por %p104, %p105
      %p107 = scmp.ne.s32.totalorder %s96, %s97
      %p108 = scmp.eq.s32.totalorder %s22, 0
      %p109 = por %p107, %p108
      %p110 = scmp.ne.s32.totalorder %s96, %s97
      %p111 = scmp.eq.s32.totalorder %s23, 7
      %p112 = por %p110, %p111
      %p114 = scmp.ne.s32.totalorder %s97, %s113
      %p115 = scmp.eq.s32.totalorder %s23, 0
      %p116 = por %p114, %p115
      %s117 = ssub.s32 %s24, %s36
      %s118 = ssub.s32 %s25, %s32
      %s119 = sor.u32 %s117, %s118
      %p120 = scmp.eq.s32.totalorder %s119, 0
      %s122 = sadd.s32 %s121, 1
      %s123 = scalar_select %p120, %s121, %s122
      %p126 = pneg %p120
      %p127 = scmp.eq.s32.totalorder %s17, 7
      %p128 = por %p126, %p127
      %p129 = scmp.ne.s32.totalorder %s121, %s124
      %p130 = scmp.eq.s32.totalorder %s17, 0
      %p131 = por %p129, %p130
      %p132 = scmp.ne.s32.totalorder %s121, %s124
      %p133 = scmp.eq.s32.totalorder %s22, 7
      %p134 = por %p132, %p133
      %p135 = scmp.ne.s32.totalorder %s124, %s125
      %p136 = scmp.eq.s32.totalorder %s22, 0
      %p137 = por %p135, %p136
      %p138 = scmp.ne.s32.totalorder %s124, %s125
      %p139 = scmp.eq.s32.totalorder %s23, 7
      %p140 = por %p138, %p139
      %p142 = scmp.ne.s32.totalorder %s125, %s141
      %p143 = scmp.eq.s32.totalorder %s23, 0
      %p144 = por %p142, %p143
      %s145 = ssub.s32 %s24, %s36
      %s146 = ssub.s32 %s25, %s32
      %s147 = sor.u32 %s145, %s146
      %p148 = scmp.eq.s32.totalorder %s147, 0
      %s150 = sadd.s32 %s149, 1
      %s151 = scalar_select %p148, %s149, %s150
      %p154 = pneg %p148
      %p155 = scmp.eq.s32.totalorder %s17, 7
      %p156 = por %p154, %p155
      %p157 = scmp.ne.s32.totalorder %s149, %s152
      %p158 = scmp.eq.s32.totalorder %s17, 0
      %p159 = por %p157, %p158
      %p160 = scmp.ne.s32.totalorder %s149, %s152
      %p161 = scmp.eq.s32.totalorder %s22, 7
      %p162 = por %p160, %p161
      %p163 = scmp.ne.s32.totalorder %s152, %s153
      %p164 = scmp.eq.s32.totalorder %s22, 0
      %p165 = por %p163, %p164
      %p166 = scmp.ne.s32.totalorder %s152, %s153
      %p167 = scmp.eq.s32.totalorder %s23, 7
      %p168 = por %p166, %p167
      %p170 = scmp.ne.s32.totalorder %s153, %s169
      %p171 = scmp.eq.s32.totalorder %s23, 0
      %p172 = por %p170, %p171
      %p173 = scmp.le.s32.totalorder 1, %s17
      %p174 = scmp.lt.s32.totalorder %s17, 9
      %p175 = pnand %p173, %p174
      %p176 = pneg %p175
      // Predicated region
      $region9: #{tpu_custom_call.1} parent=5 // pred_check
        _
      $region10: #{tpu_custom_call.1} parent=5 // pred_check_branch
        %178 = sbr.rel (%p175) target = $region12
      $region11: #{tpu_custom_call.1} parent=5 // pred_region
        %s179 = ssub.s32 %s17, 1
      $region12: #{tpu_custom_call.1} parent=5 // pred_fallthru
        _
      %p180 = scmp.lt.s32.totalorder %s17, 8
      // Predicated region
      $region13: #{tpu_custom_call.1} parent=5 // pred_check
        %p181 = pneg %p180
      $region14: #{tpu_custom_call.1} parent=5 // pred_check_branch
        %183 = sbr.rel (%p181) target = $region16
      $region15: #{tpu_custom_call.1} parent=5 // pred_region
        // Predicated region
        $region17: #{tpu_custom_call.1} parent=15 // pred_check
          %p184 = pneg %p51
        $region18: #{tpu_custom_call.1} parent=15 // pred_check_branch
          %186 = sbr.rel (%p184) target = $region20
        $region19: #{tpu_custom_call.1} parent=15 // pred_region
          %s187 = smul.u32 32, %s25
          %p188 = scmp.lt.s32.totalorder %s24, 7
          %s189 = scalar_select %p188, %s24, 7
          %p190 = scmp.lt.s32.totalorder %s187, 31
          %s191 = scalar_select %p190, %s187, 31
          %s192 = smul.addr %s189, 32
          %s193 = sadd.s32 %s191, %s192
          %s194 = smul.addr %s193, 4
          %s195 = scalar_lea.vmem %s0, %s194
          %s196 = smul.u32 32, %s25
        $region20: #{tpu_custom_call.1} parent=15 // pred_fallthru
          _
        // Predicated region
        $region21: #{tpu_custom_call.1} parent=15 // pred_check
          %p197 = pneg %p77
        $region22: #{tpu_custom_call.1} parent=15 // pred_check_branch
          %199 = sbr.rel (%p197) target = $region24
        $region23: #{tpu_custom_call.1} parent=15 // pred_region
          %p200 = scmp.lt.s32.totalorder %s24, 7
          %s201 = scalar_select %p200, %s24, 7
          %s202 = smul.addr %s201, 32
          %s203 = smul.addr %s202, 4
          %s204 = scalar_lea.vmem %s1, %s203
        $region24: #{tpu_custom_call.1} parent=15 // pred_fallthru
          _
        // Predicated region
        $region25: #{tpu_custom_call.1} parent=15 // pred_check
          %p205 = pneg %p103
        $region26: #{tpu_custom_call.1} parent=15 // pred_check_branch
          %207 = sbr.rel (%p205) target = $region28
        $region27: #{tpu_custom_call.1} parent=15 // pred_region
          %p208 = scmp.lt.s32.totalorder %s24, 7
          %s209 = scalar_select %p208, %s24, 7
          %s210 = smul.addr %s209, 32
          %s211 = smul.addr %s210, 4
          %s212 = scalar_lea.vmem %s2, %s211
        $region28: #{tpu_custom_call.1} parent=15 // pred_fallthru
          _
      $region16: #{tpu_custom_call.1} parent=5 // pred_fallthru
        _
      %p213 = scmp.le.s32.totalorder 1, %s17
      %p214 = scmp.lt.s32.totalorder %s17, 9
      %p215 = pnand %p213, %p214
      %p216 = pneg %p215
      // Predicated region
      $region29: #{tpu_custom_call.1} parent=5 // pred_check
        _
      $region30: #{tpu_custom_call.1} parent=5 // pred_check_branch
        %218 = sbr.rel (%p215) target = $region32
      $region31: #{tpu_custom_call.1} parent=5 // pred_region
        %s219 = ssub.s32 %s17, 1
        %s220 = smul.u32 32, %s27
        %p221 = scmp.lt.s32.totalorder %s26, 7
        %s222 = scalar_select %p221, %s26, 7
        %p223 = scmp.lt.s32.totalorder %s220, 31
        %s224 = scalar_select %p223, %s220, 31
        %s225 = smul.addr %s222, 32
        %s226 = sadd.s32 %s224, %s225
        %s227 = smul.addr %s226, 4
        %s228 = scalar_lea.vmem %s0, %s227
        %p229 = pneg %p57
        %p230 = pneg %p54
        %p231 = scmp.lt.s32.totalorder %s26, 7
        %s232 = scalar_select %p231, %s26, 7
        %s233 = smul.addr %s232, 32
        %s234 = smul.addr %s233, 4
        %s235 = scalar_lea.vmem %s1, %s234
        %p236 = pneg %p83
        %p237 = pneg %p80
        %p238 = scmp.lt.s32.totalorder %s26, 7
        %s239 = scalar_select %p238, %s26, 7
        %s240 = smul.addr %s239, 32
        %s241 = smul.addr %s240, 4
        %s242 = scalar_lea.vmem %s2, %s241
        %p243 = pneg %p109
        %p244 = pneg %p106
        %p245 = pneg %p137
        %p246 = pneg %p134
        %s247 = sand.u32 %s124, 1
        %s248 = scalar_lea.sflag [#allocation3], %s247
        %s249 = sand.u32 %s124, 1
        %s250 = smul.addr %s249, 256
        %s251 = scalar_lea.vmem [#allocation2], %s250
        %p252 = pneg %p165
        %p253 = pneg %p162
        %s254 = sand.u32 %s152, 1
        %s255 = scalar_lea.sflag [#allocation5], %s254
        %s256 = sand.u32 %s152, 1
        %s257 = smul.addr %s256, 256
        %s258 = scalar_lea.vmem [#allocation4], %s257
        %s259 = smul.u32 32, %s27
        %p260 = scmp.lt.s32.totalorder %s26, 7
        %s261 = scalar_select %p260, %s26, 7
        %p262 = scmp.lt.s32.totalorder %s259, 31
        %s263 = scalar_select %p262, %s259, 31
        %s264 = smul.addr %s261, 32
        %s265 = sadd.s32 %s263, %s264
        %s266 = smul.addr %s265, 4
        %s267 = scalar_lea.vmem %s0, %s266
        %s268 = smul.u32 32, %s27
        %p269 = scmp.lt.s32.totalorder %s26, 7
        %s270 = scalar_select %p269, %s26, 7
        %s271 = smul.addr %s270, 32
        %s272 = smul.addr %s271, 4
        %s273 = scalar_lea.vmem %s1, %s272
        %p274 = scmp.lt.s32.totalorder %s26, 7
        %s275 = scalar_select %p274, %s26, 7
        %s276 = smul.addr %s275, 32
        %s277 = smul.addr %s276, 4
        %s278 = scalar_lea.vmem %s2, %s277
        %s279 = smul.u32 32, %s27
        %s280 = smul.u32 32, %s27
        %v283 = vld [vmem:[%s267] sm:$0xf]
        %v284 = vld [vmem:[%s267 + $0x4] sm:$0xf]
        %v285 = vld [vmem:[%s267 + $0x8] sm:$0xf]
        %v286 = vld [vmem:[%s267 + $0xc] sm:$0xf]
        %v287 = vld [vmem:[%s267 + $0x10] sm:$0xf]
        %v288 = vld [vmem:[%s267 + $0x14] sm:$0xf]
        %v289 = vld [vmem:[%s267 + $0x18] sm:$0xf]
        %v290 = vld [vmem:[%s267 + $0x1c] sm:$0xf]
        %v291 = vld [vmem:[%s267 + $0x20] sm:$0xf]
        %v292 = vld [vmem:[%s267 + $0x24] sm:$0xf]
        %v293 = vld [vmem:[%s267 + $0x28] sm:$0xf]
        %v294 = vld [vmem:[%s267 + $0x2c] sm:$0xf]
        %v295 = vld [vmem:[%s267 + $0x30] sm:$0xf]
        %v296 = vld [vmem:[%s267 + $0x34] sm:$0xf]
        %v297 = vld [vmem:[%s267 + $0x38] sm:$0xf]
        %v298 = vld [vmem:[%s267 + $0x3c] sm:$0xf]
        %v299 = vld [vmem:[%s267 + $0x40] sm:$0xf]
        %v300 = vld [vmem:[%s267 + $0x44] sm:$0xf]
        %v301 = vld [vmem:[%s267 + $0x48] sm:$0xf]
        %v302 = vld [vmem:[%s267 + $0x4c] sm:$0xf]
        %v303 = vld [vmem:[%s267 + $0x50] sm:$0xf]
        %v304 = vld [vmem:[%s267 + $0x54] sm:$0xf]
        %v305 = vld [vmem:[%s267 + $0x58] sm:$0xf]
        %v306 = vld [vmem:[%s267 + $0x5c] sm:$0xf]
        %v307 = vld [vmem:[%s267 + $0x60] sm:$0xf]
        %v308 = vld [vmem:[%s267 + $0x64] sm:$0xf]
        %v309 = vld [vmem:[%s267 + $0x68] sm:$0xf]
        %v310 = vld [vmem:[%s267 + $0x6c] sm:$0xf]
        %v311 = vld [vmem:[%s267 + $0x70] sm:$0xf]
        %v312 = vld [vmem:[%s267 + $0x74] sm:$0xf]
        %v313 = vld [vmem:[%s267 + $0x78] sm:$0xf]
        %v314 = vld [vmem:[%s267 + $0x7c] sm:$0xf]
        %v315 = vmul.bf16 %v283, 1040203264
        %v316 = vmul.bf16 %v284, 1040203264
        %v317 = vmul.bf16 %v285, 1040203264
        %v318 = vmul.bf16 %v286, 1040203264
        %v319 = vmul.bf16 %v287, 1040203264
        %v320 = vmul.bf16 %v288, 1040203264
        %v321 = vmul.bf16 %v289, 1040203264
        %v322 = vmul.bf16 %v290, 1040203264
        %v323 = vmul.bf16 %v291, 1040203264
        %v324 = vmul.bf16 %v292, 1040203264
        %v325 = vmul.bf16 %v293, 1040203264
        %v326 = vmul.bf16 %v294, 1040203264
        %v327 = vmul.bf16 %v295, 1040203264
        %v328 = vmul.bf16 %v296, 1040203264
        %v329 = vmul.bf16 %v297, 1040203264
        %v330 = vmul.bf16 %v298, 1040203264
        %v331 = vmul.bf16 %v299, 1040203264
        %v332 = vmul.bf16 %v300, 1040203264
        %v333 = vmul.bf16 %v301, 1040203264
        %v334 = vmul.bf16 %v302, 1040203264
        %v335 = vmul.bf16 %v303, 1040203264
        %v336 = vmul.bf16 %v304, 1040203264
        %v337 = vmul.bf16 %v305, 1040203264
        %v338 = vmul.bf16 %v306, 1040203264
        %v339 = vmul.bf16 %v307, 1040203264
        %v340 = vmul.bf16 %v308, 1040203264
        %v341 = vmul.bf16 %v309, 1040203264
        %v342 = vmul.bf16 %v310, 1040203264
        %v343 = vmul.bf16 %v311, 1040203264
        %v344 = vmul.bf16 %v312, 1040203264
        %v345 = vmul.bf16 %v313, 1040203264
        %v346 = vmul.bf16 %v314, 1040203264
        %v347 = vld [vmem:[%s273] sm:$0xf]
        %v348 = vld [vmem:[%s273 + $0x4] sm:$0xf]
        %v349 = vld [vmem:[%s273 + $0x8] sm:$0xf]
        %v350 = vld [vmem:[%s273 + $0xc] sm:$0xf]
        %v351 = vld [vmem:[%s273 + $0x10] sm:$0xf]
        %v352 = vld [vmem:[%s273 + $0x14] sm:$0xf]
        %v353 = vld [vmem:[%s273 + $0x18] sm:$0xf]
        %v354 = vld [vmem:[%s273 + $0x1c] sm:$0xf]
        %v355 = vld [vmem:[%s273 + $0x20] sm:$0xf]
        %v356 = vld [vmem:[%s273 + $0x24] sm:$0xf]
        %v357 = vld [vmem:[%s273 + $0x28] sm:$0xf]
        %v358 = vld [vmem:[%s273 + $0x2c] sm:$0xf]
        %v359 = vld [vmem:[%s273 + $0x30] sm:$0xf]
        %v360 = vld [vmem:[%s273 + $0x34] sm:$0xf]
        %v361 = vld [vmem:[%s273 + $0x38] sm:$0xf]
        %v362 = vld [vmem:[%s273 + $0x3c] sm:$0xf]
        %v363 = vld [vmem:[%s273 + $0x40] sm:$0xf]
        %v364 = vld [vmem:[%s273 + $0x44] sm:$0xf]
        %v365 = vld [vmem:[%s273 + $0x48] sm:$0xf]
        %v366 = vld [vmem:[%s273 + $0x4c] sm:$0xf]
        %v367 = vld [vmem:[%s273 + $0x50] sm:$0xf]
        %v368 = vld [vmem:[%s273 + $0x54] sm:$0xf]
        %v369 = vld [vmem:[%s273 + $0x58] sm:$0xf]
        %v370 = vld [vmem:[%s273 + $0x5c] sm:$0xf]
        %v371 = vld [vmem:[%s273 + $0x60] sm:$0xf]
        %v372 = vld [vmem:[%s273 + $0x64] sm:$0xf]
        %v373 = vld [vmem:[%s273 + $0x68] sm:$0xf]
        %v374 = vld [vmem:[%s273 + $0x6c] sm:$0xf]
        %v375 = vld [vmem:[%s273 + $0x70] sm:$0xf]
        %v376 = vld [vmem:[%s273 + $0x74] sm:$0xf]
        %v377 = vld [vmem:[%s273 + $0x78] sm:$0xf]
        %v378 = vld [vmem:[%s273 + $0x7c] sm:$0xf]
        %v379 = vld [vmem:[%s278] sm:$0xf]
        %v380 = vld [vmem:[%s278 + $0x4] sm:$0xf]
        %v381 = vld [vmem:[%s278 + $0x8] sm:$0xf]
        %v382 = vld [vmem:[%s278 + $0xc] sm:$0xf]
        %v383 = vld [vmem:[%s278 + $0x10] sm:$0xf]
        %v384 = vld [vmem:[%s278 + $0x14] sm:$0xf]
        %v385 = vld [vmem:[%s278 + $0x18] sm:$0xf]
        %v386 = vld [vmem:[%s278 + $0x1c] sm:$0xf]
        %v387 = vld [vmem:[%s278 + $0x20] sm:$0xf]
        %v388 = vld [vmem:[%s278 + $0x24] sm:$0xf]
        %v389 = vld [vmem:[%s278 + $0x28] sm:$0xf]
        %v390 = vld [vmem:[%s278 + $0x2c] sm:$0xf]
        %v391 = vld [vmem:[%s278 + $0x30] sm:$0xf]
        %v392 = vld [vmem:[%s278 + $0x34] sm:$0xf]
        %v393 = vld [vmem:[%s278 + $0x38] sm:$0xf]
        %v394 = vld [vmem:[%s278 + $0x3c] sm:$0xf]
        %v395 = vld [vmem:[%s278 + $0x40] sm:$0xf]
        %v396 = vld [vmem:[%s278 + $0x44] sm:$0xf]
        %v397 = vld [vmem:[%s278 + $0x48] sm:$0xf]
        %v398 = vld [vmem:[%s278 + $0x4c] sm:$0xf]
        %v399 = vld [vmem:[%s278 + $0x50] sm:$0xf]
        %v400 = vld [vmem:[%s278 + $0x54] sm:$0xf]
        %v401 = vld [vmem:[%s278 + $0x58] sm:$0xf]
        %v402 = vld [vmem:[%s278 + $0x5c] sm:$0xf]
        %v403 = vld [vmem:[%s278 + $0x60] sm:$0xf]
        %v404 = vld [vmem:[%s278 + $0x64] sm:$0xf]
        %v405 = vld [vmem:[%s278 + $0x68] sm:$0xf]
        %v406 = vld [vmem:[%s278 + $0x6c] sm:$0xf]
        %v407 = vld [vmem:[%s278 + $0x70] sm:$0xf]
        %v408 = vld [vmem:[%s278 + $0x74] sm:$0xf]
        %v409 = vld [vmem:[%s278 + $0x78] sm:$0xf]
        %v410 = vld [vmem:[%s278 + $0x7c] sm:$0xf]
        %v443 = vunpack.c.l.b16 %v315
        %v444 = vunpack.c.l.b16 %v316
        %v445 = vunpack.c.l.b16 %v317
        %v446 = vunpack.c.l.b16 %v318
        %v447 = vunpack.c.l.b16 %v319
        %v448 = vunpack.c.l.b16 %v320
        %v449 = vunpack.c.l.b16 %v321
        %v450 = vunpack.c.l.b16 %v322
        %v451 = vunpack.c.l.b16 %v323
        %v452 = vunpack.c.l.b16 %v324
        %v453 = vunpack.c.l.b16 %v325
        %v454 = vunpack.c.l.b16 %v326
        %v455 = vunpack.c.l.b16 %v327
        %v456 = vunpack.c.l.b16 %v328
        %v457 = vunpack.c.l.b16 %v329
        %v458 = vunpack.c.l.b16 %v330
        %v459 = vunpack.c.l.b16 %v331
        %v460 = vunpack.c.l.b16 %v332
        %v461 = vunpack.c.l.b16 %v333
        %v462 = vunpack.c.l.b16 %v334
        %v463 = vunpack.c.l.b16 %v335
        %v464 = vunpack.c.l.b16 %v336
        %v465 = vunpack.c.l.b16 %v337
        %v466 = vunpack.c.l.b16 %v338
        %v467 = vunpack.c.l.b16 %v339
        %v468 = vunpack.c.l.b16 %v340
        %v469 = vunpack.c.l.b16 %v341
        %v470 = vunpack.c.l.b16 %v342
        %v471 = vunpack.c.l.b16 %v343
        %v472 = vunpack.c.l.b16 %v344
        %v473 = vunpack.c.l.b16 %v345
        %v474 = vunpack.c.l.b16 %v346
        %v475 = vpack.c.b16 %v444, %v443
        %v476 = vpack.c.b16 %v446, %v445
        %v477 = vpack.c.b16 %v448, %v447
        %v478 = vpack.c.b16 %v450, %v449
        %v479 = vpack.c.b16 %v452, %v451
        %v480 = vpack.c.b16 %v454, %v453
        %v481 = vpack.c.b16 %v456, %v455
        %v482 = vpack.c.b16 %v458, %v457
        %v483 = vpack.c.b16 %v460, %v459
        %v484 = vpack.c.b16 %v462, %v461
        %v485 = vpack.c.b16 %v464, %v463
        %v486 = vpack.c.b16 %v466, %v465
        %v487 = vpack.c.b16 %v468, %v467
        %v488 = vpack.c.b16 %v470, %v469
        %v489 = vpack.c.b16 %v472, %v471
        %v490 = vpack.c.b16 %v474, %v473
        %v523 = vunpack.c.l.b16 %v347
        %v524 = vunpack.c.l.b16 %v348
        %v525 = vunpack.c.l.b16 %v349
        %v526 = vunpack.c.l.b16 %v350
        %v527 = vunpack.c.l.b16 %v351
        %v528 = vunpack.c.l.b16 %v352
        %v529 = vunpack.c.l.b16 %v353
        %v530 = vunpack.c.l.b16 %v354
        %v531 = vunpack.c.l.b16 %v355
        %v532 = vunpack.c.l.b16 %v356
        %v533 = vunpack.c.l.b16 %v357
        %v534 = vunpack.c.l.b16 %v358
        %v535 = vunpack.c.l.b16 %v359
        %v536 = vunpack.c.l.b16 %v360
        %v537 = vunpack.c.l.b16 %v361
        %v538 = vunpack.c.l.b16 %v362
        %v539 = vunpack.c.l.b16 %v363
        %v540 = vunpack.c.l.b16 %v364
        %v541 = vunpack.c.l.b16 %v365
        %v542 = vunpack.c.l.b16 %v366
        %v543 = vunpack.c.l.b16 %v367
        %v544 = vunpack.c.l.b16 %v368
        %v545 = vunpack.c.l.b16 %v369
        %v546 = vunpack.c.l.b16 %v370
        %v547 = vunpack.c.l.b16 %v371
        %v548 = vunpack.c.l.b16 %v372
        %v549 = vunpack.c.l.b16 %v373
        %v550 = vunpack.c.l.b16 %v374
        %v551 = vunpack.c.l.b16 %v375
        %v552 = vunpack.c.l.b16 %v376
        %v553 = vunpack.c.l.b16 %v377
        %v554 = vunpack.c.l.b16 %v378
        %v555 = vpack.c.b16 %v524, %v523
        %v556 = vpack.c.b16 %v526, %v525
        %v557 = vpack.c.b16 %v528, %v527
        %v558 = vpack.c.b16 %v530, %v529
        %v559 = vpack.c.b16 %v532, %v531
        %v560 = vpack.c.b16 %v534, %v533
        %v561 = vpack.c.b16 %v536, %v535
        %v562 = vpack.c.b16 %v538, %v537
        %v563 = vpack.c.b16 %v540, %v539
        %v564 = vpack.c.b16 %v542, %v541
        %v565 = vpack.c.b16 %v544, %v543
        %v566 = vpack.c.b16 %v546, %v545
        %v567 = vpack.c.b16 %v548, %v547
        %v568 = vpack.c.b16 %v550, %v549
        %v569 = vpack.c.b16 %v552, %v551
        %v570 = vpack.c.b16 %v554, %v553
        %vm571 = vcmask 523264
        %v573 = vsel %vm571, %v475, 0
        %v576 = vsel %vm571, %v476, 0
        %v579 = vsel %vm571, %v477, 0
        %v582 = vsel %vm571, %v478, 0
        %v585 = vsel %vm571, %v479, 0
        %v588 = vsel %vm571, %v480, 0
        %v591 = vsel %vm571, %v481, 0
        %v594 = vsel %vm571, %v482, 0
        %v597 = vsel %vm571, %v483, 0
        %v600 = vsel %vm571, %v484, 0
        %v603 = vsel %vm571, %v485, 0
        %v606 = vsel %vm571, %v486, 0
        %v609 = vsel %vm571, %v487, 0
        %v612 = vsel %vm571, %v488, 0
        %v615 = vsel %vm571, %v489, 0
        %v618 = vsel %vm571, %v490, 0
        %v621 = vsel %vm571, %v555, 0
        %v624 = vsel %vm571, %v556, 0
        %v627 = vsel %vm571, %v557, 0
        %v630 = vsel %vm571, %v558, 0
        %v633 = vsel %vm571, %v559, 0
        %v636 = vsel %vm571, %v560, 0
        %v639 = vsel %vm571, %v561, 0
        %v642 = vsel %vm571, %v562, 0
        %v645 = vsel %vm571, %v563, 0
        %v648 = vsel %vm571, %v564, 0
        %v651 = vsel %vm571, %v565, 0
        %v654 = vsel %vm571, %v566, 0
        %v657 = vsel %vm571, %v567, 0
        %v660 = vsel %vm571, %v568, 0
        %v663 = vsel %vm571, %v569, 0
        %v666 = vsel %vm571, %v570, 0
        %668 = vmatprep.subr.bf16.mxu0 0
        %669 = vmatpush1.bf16.xpose.msra.mxu0 %v642
        %670 = vmatprep.subr.bf16.mxu0 0
        %671 = vmatpush1.bf16.xpose.msra.mxu0 %v639
        %672 = vmatprep.subr.bf16.mxu0 0
        %673 = vmatpush1.bf16.xpose.msra.mxu0 %v636
        %674 = vmatprep.subr.bf16.mxu0 0
        %675 = vmatpush1.bf16.xpose.msra.mxu0 %v633
        %676 = vmatprep.subr.bf16.mxu0 0
        %677 = vmatpush1.bf16.xpose.msra.mxu0 %v630
        %678 = vmatprep.subr.bf16.mxu0 0
        %679 = vmatpush1.bf16.xpose.msra.mxu0 %v627
        %680 = vmatprep.subr.bf16.mxu0 0
        %681 = vmatpush1.bf16.xpose.msra.mxu0 %v624
        %682 = vmatprep.subr.bf16.mxu0 0
        %683 = vmatpush1.bf16.xpose.msra.mxu0 %v621
        %684 = vmatprep.subr.bf16.mxu0 0
        %685 = vmatpush2.bf16.xpose.msra.mxu0 %v666
        %686 = vmatprep.subr.bf16.mxu0 0
        %687 = vmatpush2.bf16.xpose.msra.mxu0 %v663
        %688 = vmatprep.subr.bf16.mxu0 0
        %689 = vmatpush2.bf16.xpose.msra.mxu0 %v660
        %690 = vmatprep.subr.bf16.mxu0 0
        %691 = vmatpush2.bf16.xpose.msra.mxu0 %v657
        %692 = vmatprep.subr.bf16.mxu0 0
        %693 = vmatpush2.bf16.xpose.msra.mxu0 %v654
        %694 = vmatprep.subr.bf16.mxu0 0
        %695 = vmatpush2.bf16.xpose.msra.mxu0 %v651
        %696 = vmatprep.subr.bf16.mxu0 0
        %697 = vmatpush2.bf16.xpose.msra.mxu0 %v648
        %698 = vmatprep.subr.bf16.mxu0 0
        %699 = vmatpush2.bf16.xpose.msra.mxu0 %v645
        %700 = vmatprep.mubr.bf16.mxu0 0
        %701 = vmatmul.mubr.bf16.gmra.mxu0 %v573
        %v702 = vpop.f32.mrf.mxu0
        %v703 = vadd.f32 0.0, %v702
        %v704 = vpop.f32.mrf.mxu0
        %v705 = vadd.f32 0.0, %v704
        %v706 = vpop.f32.mrf.mxu0
        %v707 = vadd.f32 0.0, %v706
        %v708 = vpop.f32.mrf.mxu0
        %v709 = vadd.f32 0.0, %v708
        %710 = vmatprep.mubr.bf16.mxu0 0
        %711 = vmatmul.mubr.bf16.gmra.mxu0 %v576
        %v712 = vpop.f32.mrf.mxu0
        %v713 = vadd.f32 0.0, %v712
        %v714 = vpop.f32.mrf.mxu0
        %v715 = vadd.f32 0.0, %v714
        %v716 = vpop.f32.mrf.mxu0
        %v717 = vadd.f32 0.0, %v716
        %v718 = vpop.f32.mrf.mxu0
        %v719 = vadd.f32 0.0, %v718
        %720 = vmatprep.mubr.bf16.mxu0 0
        %721 = vmatmul.mubr.bf16.gmra.mxu0 %v579
        %v722 = vpop.f32.mrf.mxu0
        %v723 = vadd.f32 0.0, %v722
        %v724 = vpop.f32.mrf.mxu0
        %v725 = vadd.f32 0.0, %v724
        %v726 = vpop.f32.mrf.mxu0
        %v727 = vadd.f32 0.0, %v726
        %v728 = vpop.f32.mrf.mxu0
        %v729 = vadd.f32 0.0, %v728
        %730 = vmatprep.mubr.bf16.mxu0 0
        %731 = vmatmul.mubr.bf16.gmra.mxu0 %v582
        %v732 = vpop.f32.mrf.mxu0
        %v733 = vadd.f32 0.0, %v732
        %v734 = vpop.f32.mrf.mxu0
        %v735 = vadd.f32 0.0, %v734
        %v736 = vpop.f32.mrf.mxu0
        %v737 = vadd.f32 0.0, %v736
        %v738 = vpop.f32.mrf.mxu0
        %v739 = vadd.f32 0.0, %v738
        %740 = vmatprep.mubr.bf16.mxu0 0
        %741 = vmatmul.mubr.bf16.gmra.mxu0 %v585
        %v742 = vpop.f32.mrf.mxu0
        %v743 = vadd.f32 0.0, %v742
        %v744 = vpop.f32.mrf.mxu0
        %v745 = vadd.f32 0.0, %v744
        %v746 = vpop.f32.mrf.mxu0
        %v747 = vadd.f32 0.0, %v746
        %v748 = vpop.f32.mrf.mxu0
        %v749 = vadd.f32 0.0, %v748
        %750 = vmatprep.mubr.bf16.mxu0 0
        %751 = vmatmul.mubr.bf16.gmra.mxu0 %v588
        %v752 = vpop.f32.mrf.mxu0
        %v753 = vadd.f32 0.0, %v752
        %v754 = vpop.f32.mrf.mxu0
        %v755 = vadd.f32 0.0, %v754
        %v756 = vpop.f32.mrf.mxu0
        %v757 = vadd.f32 0.0, %v756
        %v758 = vpop.f32.mrf.mxu0
        %v759 = vadd.f32 0.0, %v758
        %760 = vmatprep.mubr.bf16.mxu0 0
        %761 = vmatmul.mubr.bf16.gmra.mxu0 %v591
        %v762 = vpop.f32.mrf.mxu0
        %v763 = vadd.f32 0.0, %v762
        %v764 = vpop.f32.mrf.mxu0
        %v765 = vadd.f32 0.0, %v764
        %v766 = vpop.f32.mrf.mxu0
        %v767 = vadd.f32 0.0, %v766
        %v768 = vpop.f32.mrf.mxu0
        %v769 = vadd.f32 0.0, %v768
        %770 = vmatprep.mubr.bf16.mxu0 0
        %771 = vmatmul.mubr.bf16.gmra.mxu0 %v594
        %v772 = vpop.f32.mrf.mxu0
        %v773 = vadd.f32 0.0, %v772
        %v774 = vpop.f32.mrf.mxu0
        %v775 = vadd.f32 0.0, %v774
        %v776 = vpop.f32.mrf.mxu0
        %v777 = vadd.f32 0.0, %v776
        %v778 = vpop.f32.mrf.mxu0
        %v779 = vadd.f32 0.0, %v778
        %780 = vmatprep.mubr.bf16.mxu0 0
        %781 = vmatmul.mubr.bf16.gmra.mxu0 %v597
        %v782 = vpop.f32.mrf.mxu0
        %v783 = vadd.f32 0.0, %v782
        %v784 = vpop.f32.mrf.mxu0
        %v785 = vadd.f32 0.0, %v784
        %v786 = vpop.f32.mrf.mxu0
        %v787 = vadd.f32 0.0, %v786
        %v788 = vpop.f32.mrf.mxu0
        %v789 = vadd.f32 0.0, %v788
        %790 = vmatprep.mubr.bf16.mxu0 0
        %791 = vmatmul.mubr.bf16.gmra.mxu0 %v600
        %v792 = vpop.f32.mrf.mxu0
        %v793 = vadd.f32 0.0, %v792
        %v794 = vpop.f32.mrf.mxu0
        %v795 = vadd.f32 0.0, %v794
        %v796 = vpop.f32.mrf.mxu0
        %v797 = vadd.f32 0.0, %v796
        %v798 = vpop.f32.mrf.mxu0
        %v799 = vadd.f32 0.0, %v798
        %800 = vmatprep.mubr.bf16.mxu0 0
        %801 = vmatmul.mubr.bf16.gmra.mxu0 %v603
        %v802 = vpop.f32.mrf.mxu0
        %v803 = vadd.f32 0.0, %v802
        %v804 = vpop.f32.mrf.mxu0
        %v805 = vadd.f32 0.0, %v804
        %v806 = vpop.f32.mrf.mxu0
        %v807 = vadd.f32 0.0, %v806
        %v808 = vpop.f32.mrf.mxu0
        %v809 = vadd.f32 0.0, %v808
        %810 = vmatprep.mubr.bf16.mxu0 0
        %811 = vmatmul.mubr.bf16.gmra.mxu0 %v606
        %v812 = vpop.f32.mrf.mxu0
        %v813 = vadd.f32 0.0, %v812
        %v814 = vpop.f32.mrf.mxu0
        %v815 = vadd.f32 0.0, %v814
        %v816 = vpop.f32.mrf.mxu0
        %v817 = vadd.f32 0.0, %v816
        %v818 = vpop.f32.mrf.mxu0
        %v819 = vadd.f32 0.0, %v818
        %820 = vmatprep.mubr.bf16.mxu0 0
        %821 = vmatmul.mubr.bf16.gmra.mxu0 %v609
        %v822 = vpop.f32.mrf.mxu0
        %v823 = vadd.f32 0.0, %v822
        %v824 = vpop.f32.mrf.mxu0
        %v825 = vadd.f32 0.0, %v824
        %v826 = vpop.f32.mrf.mxu0
        %v827 = vadd.f32 0.0, %v826
        %v828 = vpop.f32.mrf.mxu0
        %v829 = vadd.f32 0.0, %v828
        %830 = vmatprep.mubr.bf16.mxu0 0
        %831 = vmatmul.mubr.bf16.gmra.mxu0 %v612
        %v832 = vpop.f32.mrf.mxu0
        %v833 = vadd.f32 0.0, %v832
        %v834 = vpop.f32.mrf.mxu0
        %v835 = vadd.f32 0.0, %v834
        %v836 = vpop.f32.mrf.mxu0
        %v837 = vadd.f32 0.0, %v836
        %v838 = vpop.f32.mrf.mxu0
        %v839 = vadd.f32 0.0, %v838
        %840 = vmatprep.mubr.bf16.mxu0 0
        %841 = vmatmul.mubr.bf16.gmra.mxu0 %v615
        %v842 = vpop.f32.mrf.mxu0
        %v843 = vadd.f32 0.0, %v842
        %v844 = vpop.f32.mrf.mxu0
        %v845 = vadd.f32 0.0, %v844
        %v846 = vpop.f32.mrf.mxu0
        %v847 = vadd.f32 0.0, %v846
        %v848 = vpop.f32.mrf.mxu0
        %v849 = vadd.f32 0.0, %v848
        %850 = vmatprep.mubr.bf16.mxu0 0
        %851 = vmatmul.mubr.bf16.gmra.mxu0 %v618
        %v852 = vpop.f32.mrf.mxu0
        %v853 = vadd.f32 0.0, %v852
        %v854 = vpop.f32.mrf.mxu0
        %v855 = vadd.f32 0.0, %v854
        %v856 = vpop.f32.mrf.mxu0
        %v857 = vadd.f32 0.0, %v856
        %v858 = vpop.f32.mrf.mxu0
        %v859 = vadd.f32 0.0, %v858
        %860 = vdwg.mxu0
        %s861 = smul.u32 %s27, 256
        %v862 = vlaneseq
        %v863 = vshrl.u32 %v862, 7
        %v864 = vadd.s32 %v863, 8
        %v865 = vadd.s32 %v863, 16
        %v866 = vadd.s32 %v863, 24
        %v867 = vadd.s32 %v863, 32
        %v868 = vadd.s32 %v863, 40
        %v869 = vadd.s32 %v863, 48
        %v870 = vadd.s32 %v863, 56
        %v871 = vadd.s32 %v863, 64
        %v872 = vadd.s32 %v863, 72
        %v873 = vadd.s32 %v863, 80
        %v874 = vadd.s32 %v863, 88
        %v875 = vadd.s32 %v863, 96
        %v876 = vadd.s32 %v863, 104
        %v877 = vadd.s32 %v863, 112
        %v878 = vadd.s32 %v863, 120
        %v879 = vadd.s32 %v863, 128
        %v880 = vadd.s32 %v863, 136
        %v881 = vadd.s32 %v863, 144
        %v882 = vadd.s32 %v863, 152
        %v883 = vadd.s32 %v863, 160
        %v884 = vadd.s32 %v863, 168
        %v885 = vadd.s32 %v863, 176
        %v886 = vadd.s32 %v863, 184
        %v887 = vadd.s32 %v863, 192
        %v888 = vadd.s32 %v863, 200
        %v889 = vadd.s32 %v863, 208
        %v890 = vadd.s32 %v863, 216
        %v891 = vadd.s32 %v863, 224
        %v892 = vadd.s32 %v863, 232
        %v893 = vadd.s32 %v863, 240
        %v894 = vadd.s32 %v863, 248
        %v895 = vstv %s861
        %v896 = vadd.s32 %v863, %v895
        %v897 = vadd.s32 %v864, %v895
        %v898 = vadd.s32 %v865, %v895
        %v899 = vadd.s32 %v866, %v895
        %v900 = vadd.s32 %v867, %v895
        %v901 = vadd.s32 %v868, %v895
        %v902 = vadd.s32 %v869, %v895
        %v903 = vadd.s32 %v870, %v895
        %v904 = vadd.s32 %v871, %v895
        %v905 = vadd.s32 %v872, %v895
        %v906 = vadd.s32 %v873, %v895
        %v907 = vadd.s32 %v874, %v895
        %v908 = vadd.s32 %v875, %v895
        %v909 = vadd.s32 %v876, %v895
        %v910 = vadd.s32 %v877, %v895
        %v911 = vadd.s32 %v878, %v895
        %v912 = vadd.s32 %v879, %v895
        %v913 = vadd.s32 %v880, %v895
        %v914 = vadd.s32 %v881, %v895
        %v915 = vadd.s32 %v882, %v895
        %v916 = vadd.s32 %v883, %v895
        %v917 = vadd.s32 %v884, %v895
        %v918 = vadd.s32 %v885, %v895
        %v919 = vadd.s32 %v886, %v895
        %v920 = vadd.s32 %v887, %v895
        %v921 = vadd.s32 %v888, %v895
        %v922 = vadd.s32 %v889, %v895
        %v923 = vadd.s32 %v890, %v895
        %v924 = vadd.s32 %v891, %v895
        %v925 = vadd.s32 %v892, %v895
        %v926 = vadd.s32 %v893, %v895
        %v927 = vadd.s32 %v894, %v895
        %v928 = vlaneseq
        %v929 = vand.u32 %v928, 127
        %v930 = vadd.s32 %v929, 128
        %vm931 = vcmp.gt.s32.totalorder %v929, %v896
        %vm932 = vcmp.gt.s32.totalorder %v930, %v896
        %vm933 = vcmp.gt.s32.totalorder %v929, %v897
        %vm934 = vcmp.gt.s32.totalorder %v930, %v897
        %vm935 = vcmp.gt.s32.totalorder %v929, %v898
        %vm936 = vcmp.gt.s32.totalorder %v930, %v898
        %vm937 = vcmp.gt.s32.totalorder %v929, %v899
        %vm938 = vcmp.gt.s32.totalorder %v930, %v899
        %vm939 = vcmp.gt.s32.totalorder %v929, %v900
        %vm940 = vcmp.gt.s32.totalorder %v930, %v900
        %vm941 = vcmp.gt.s32.totalorder %v929, %v901
        %vm942 = vcmp.gt.s32.totalorder %v930, %v901
        %vm943 = vcmp.gt.s32.totalorder %v929, %v902
        %vm944 = vcmp.gt.s32.totalorder %v930, %v902
        %vm945 = vcmp.gt.s32.totalorder %v929, %v903
        %vm946 = vcmp.gt.s32.totalorder %v930, %v903
        %vm947 = vcmp.gt.s32.totalorder %v929, %v904
        %vm948 = vcmp.gt.s32.totalorder %v930, %v904
        %vm949 = vcmp.gt.s32.totalorder %v929, %v905
        %vm950 = vcmp.gt.s32.totalorder %v930, %v905
        %vm951 = vcmp.gt.s32.totalorder %v929, %v906
        %vm952 = vcmp.gt.s32.totalorder %v930, %v906
        %vm953 = vcmp.gt.s32.totalorder %v929, %v907
        %vm954 = vcmp.gt.s32.totalorder %v930, %v907
        %vm955 = vcmp.gt.s32.totalorder %v929, %v908
        %vm956 = vcmp.gt.s32.totalorder %v930, %v908
        %vm957 = vcmp.gt.s32.totalorder %v929, %v909
        %vm958 = vcmp.gt.s32.totalorder %v930, %v909
        %vm959 = vcmp.gt.s32.totalorder %v929, %v910
        %vm960 = vcmp.gt.s32.totalorder %v930, %v910
        %vm961 = vcmp.gt.s32.totalorder %v929, %v911
        %vm962 = vcmp.gt.s32.totalorder %v930, %v911
        %vm963 = vcmp.gt.s32.totalorder %v929, %v912
        %vm964 = vcmp.gt.s32.totalorder %v930, %v912
        %vm965 = vcmp.gt.s32.totalorder %v929, %v913
        %vm966 = vcmp.gt.s32.totalorder %v930, %v913
        %vm967 = vcmp.gt.s32.totalorder %v929, %v914
        %vm968 = vcmp.gt.s32.totalorder %v930, %v914
        %vm969 = vcmp.gt.s32.totalorder %v929, %v915
        %vm970 = vcmp.gt.s32.totalorder %v930, %v915
        %vm971 = vcmp.gt.s32.totalorder %v929, %v916
        %vm972 = vcmp.gt.s32.totalorder %v930, %v916
        %vm973 = vcmp.gt.s32.totalorder %v929, %v917
        %vm974 = vcmp.gt.s32.totalorder %v930, %v917
        %vm975 = vcmp.gt.s32.totalorder %v929, %v918
        %vm976 = vcmp.gt.s32.totalorder %v930, %v918
        %vm977 = vcmp.gt.s32.totalorder %v929, %v919
        %vm978 = vcmp.gt.s32.totalorder %v930, %v919
        %vm979 = vcmp.gt.s32.totalorder %v929, %v920
        %vm980 = vcmp.gt.s32.totalorder %v930, %v920
        %vm981 = vcmp.gt.s32.totalorder %v929, %v921
        %vm982 = vcmp.gt.s32.totalorder %v930, %v921
        %vm983 = vcmp.gt.s32.totalorder %v929, %v922
        %vm984 = vcmp.gt.s32.totalorder %v930, %v922
        %vm985 = vcmp.gt.s32.totalorder %v929, %v923
        %vm986 = vcmp.gt.s32.totalorder %v930, %v923
        %vm987 = vcmp.gt.s32.totalorder %v929, %v924
        %vm988 = vcmp.gt.s32.totalorder %v930, %v924
        %vm989 = vcmp.gt.s32.totalorder %v929, %v925
        %vm990 = vcmp.gt.s32.totalorder %v930, %v925
        %vm991 = vcmp.gt.s32.totalorder %v929, %v926
        %vm992 = vcmp.gt.s32.totalorder %v930, %v926
        %vm993 = vcmp.gt.s32.totalorder %v929, %v927
        %vm994 = vcmp.gt.s32.totalorder %v930, %v927
        %v995 = vsel %vm931, -1e+09, %v703
        %v996 = vsel %vm932, -1e+09, %v705
        %v997 = vsel %vm933, -1e+09, %v707
        %v998 = vsel %vm934, -1e+09, %v709
        %v999 = vsel %vm935, -1e+09, %v713
        %v1000 = vsel %vm936, -1e+09, %v715
        %v1001 = vsel %vm937, -1e+09, %v717
        %v1002 = vsel %vm938, -1e+09, %v719
        %v1003 = vsel %vm939, -1e+09, %v723
        %v1004 = vsel %vm940, -1e+09, %v725
        %v1005 = vsel %vm941, -1e+09, %v727
        %v1006 = vsel %vm942, -1e+09, %v729
        %v1007 = vsel %vm943, -1e+09, %v733
        %v1008 = vsel %vm944, -1e+09, %v735
        %v1009 = vsel %vm945, -1e+09, %v737
        %v1010 = vsel %vm946, -1e+09, %v739
        %v1011 = vsel %vm947, -1e+09, %v743
        %v1012 = vsel %vm948, -1e+09, %v745
        %v1013 = vsel %vm949, -1e+09, %v747
        %v1014 = vsel %vm950, -1e+09, %v749
        %v1015 = vsel %vm951, -1e+09, %v753
        %v1016 = vsel %vm952, -1e+09, %v755
        %v1017 = vsel %vm953, -1e+09, %v757
        %v1018 = vsel %vm954, -1e+09, %v759
        %v1019 = vsel %vm955, -1e+09, %v763
        %v1020 = vsel %vm956, -1e+09, %v765
        %v1021 = vsel %vm957, -1e+09, %v767
        %v1022 = vsel %vm958, -1e+09, %v769
        %v1023 = vsel %vm959, -1e+09, %v773
        %v1024 = vsel %vm960, -1e+09, %v775
        %v1025 = vsel %vm961, -1e+09, %v777
        %v1026 = vsel %vm962, -1e+09, %v779
        %v1027 = vsel %vm963, -1e+09, %v783
        %v1028 = vsel %vm964, -1e+09, %v785
        %v1029 = vsel %vm965, -1e+09, %v787
        %v1030 = vsel %vm966, -1e+09, %v789
        %v1031 = vsel %vm967, -1e+09, %v793
        %v1032 = vsel %vm968, -1e+09, %v795
        %v1033 = vsel %vm969, -1e+09, %v797
        %v1034 = vsel %vm970, -1e+09, %v799
        %v1035 = vsel %vm971, -1e+09, %v803
        %v1036 = vsel %vm972, -1e+09, %v805
        %v1037 = vsel %vm973, -1e+09, %v807
        %v1038 = vsel %vm974, -1e+09, %v809
        %v1039 = vsel %vm975, -1e+09, %v813
        %v1040 = vsel %vm976, -1e+09, %v815
        %v1041 = vsel %vm977, -1e+09, %v817
        %v1042 = vsel %vm978, -1e+09, %v819
        %v1043 = vsel %vm979, -1e+09, %v823
        %v1044 = vsel %vm980, -1e+09, %v825
        %v1045 = vsel %vm981, -1e+09, %v827
        %v1046 = vsel %vm982, -1e+09, %v829
        %v1047 = vsel %vm983, -1e+09, %v833
        %v1048 = vsel %vm984, -1e+09, %v835
        %v1049 = vsel %vm985, -1e+09, %v837
        %v1050 = vsel %vm986, -1e+09, %v839
        %v1051 = vsel %vm987, -1e+09, %v843
        %v1052 = vsel %vm988, -1e+09, %v845
        %v1053 = vsel %vm989, -1e+09, %v847
        %v1054 = vsel %vm990, -1e+09, %v849
        %v1055 = vsel %vm991, -1e+09, %v853
        %v1056 = vsel %vm992, -1e+09, %v855
        %v1057 = vsel %vm993, -1e+09, %v857
        %v1058 = vsel %vm994, -1e+09, %v859
        %v1059 = vmax.f32 %v995, %v996
        %1060 = vmax.xlane.f32.xlu0 %v1059
        %v1061 = vpop.xlane.xlu0 %1060
        %v1062 = vmax.f32 %v997, %v998
        %1063 = vmax.xlane.f32.xlu0 %v1062
        %v1064 = vpop.xlane.xlu0 %1063
        %v1065 = vmax.f32 %v999, %v1000
        %1066 = vmax.xlane.f32.xlu0 %v1065
        %v1067 = vpop.xlane.xlu0 %1066
        %v1068 = vmax.f32 %v1001, %v1002
        %1069 = vmax.xlane.f32.xlu0 %v1068
        %v1070 = vpop.xlane.xlu0 %1069
        %v1071 = vmax.f32 %v1003, %v1004
        %1072 = vmax.xlane.f32.xlu0 %v1071
        %v1073 = vpop.xlane.xlu0 %1072
        %v1074 = vmax.f32 %v1005, %v1006
        %1075 = vmax.xlane.f32.xlu0 %v1074
        %v1076 = vpop.xlane.xlu0 %1075
        %v1077 = vmax.f32 %v1007, %v1008
        %1078 = vmax.xlane.f32.xlu0 %v1077
        %v1079 = vpop.xlane.xlu0 %1078
        %v1080 = vmax.f32 %v1009, %v1010
        %1081 = vmax.xlane.f32.xlu0 %v1080
        %v1082 = vpop.xlane.xlu0 %1081
        %v1083 = vmax.f32 %v1011, %v1012
        %1084 = vmax.xlane.f32.xlu0 %v1083
        %v1085 = vpop.xlane.xlu0 %1084
        %v1086 = vmax.f32 %v1013, %v1014
        %1087 = vmax.xlane.f32.xlu0 %v1086
        %v1088 = vpop.xlane.xlu0 %1087
        %v1089 = vmax.f32 %v1015, %v1016
        %1090 = vmax.xlane.f32.xlu0 %v1089
        %v1091 = vpop.xlane.xlu0 %1090
        %v1092 = vmax.f32 %v1017, %v1018
        %1093 = vmax.xlane.f32.xlu0 %v1092
        %v1094 = vpop.xlane.xlu0 %1093
        %v1095 = vmax.f32 %v1019, %v1020
        %1096 = vmax.xlane.f32.xlu0 %v1095
        %v1097 = vpop.xlane.xlu0 %1096
        %v1098 = vmax.f32 %v1021, %v1022
        %1099 = vmax.xlane.f32.xlu0 %v1098
        %v1100 = vpop.xlane.xlu0 %1099
        %v1101 = vmax.f32 %v1023, %v1024
        %1102 = vmax.xlane.f32.xlu0 %v1101
        %v1103 = vpop.xlane.xlu0 %1102
        %v1104 = vmax.f32 %v1025, %v1026
        %1105 = vmax.xlane.f32.xlu0 %v1104
        %v1106 = vpop.xlane.xlu0 %1105
        %v1107 = vmax.f32 %v1027, %v1028
        %1108 = vmax.xlane.f32.xlu0 %v1107
        %v1109 = vpop.xlane.xlu0 %1108
        %v1110 = vmax.f32 %v1029, %v1030
        %1111 = vmax.xlane.f32.xlu0 %v1110
        %v1112 = vpop.xlane.xlu0 %1111
        %v1113 = vmax.f32 %v1031, %v1032
        %1114 = vmax.xlane.f32.xlu0 %v1113
        %v1115 = vpop.xlane.xlu0 %1114
        %v1116 = vmax.f32 %v1033, %v1034
        %1117 = vmax.xlane.f32.xlu0 %v1116
        %v1118 = vpop.xlane.xlu0 %1117
        %v1119 = vmax.f32 %v1035, %v1036
        %1120 = vmax.xlane.f32.xlu0 %v1119
        %v1121 = vpop.xlane.xlu0 %1120
        %v1122 = vmax.f32 %v1037, %v1038
        %1123 = vmax.xlane.f32.xlu0 %v1122
        %v1124 = vpop.xlane.xlu0 %1123
        %v1125 = vmax.f32 %v1039, %v1040
        %1126 = vmax.xlane.f32.xlu0 %v1125
        %v1127 = vpop.xlane.xlu0 %1126
        %v1128 = vmax.f32 %v1041, %v1042
        %1129 = vmax.xlane.f32.xlu0 %v1128
        %v1130 = vpop.xlane.xlu0 %1129
        %v1131 = vmax.f32 %v1043, %v1044
        %1132 = vmax.xlane.f32.xlu0 %v1131
        %v1133 = vpop.xlane.xlu0 %1132
        %v1134 = vmax.f32 %v1045, %v1046
        %1135 = vmax.xlane.f32.xlu0 %v1134
        %v1136 = vpop.xlane.xlu0 %1135
        %v1137 = vmax.f32 %v1047, %v1048
        %1138 = vmax.xlane.f32.xlu0 %v1137
        %v1139 = vpop.xlane.xlu0 %1138
        %v1140 = vmax.f32 %v1049, %v1050
        %1141 = vmax.xlane.f32.xlu0 %v1140
        %v1142 = vpop.xlane.xlu0 %1141
        %v1143 = vmax.f32 %v1051, %v1052
        %1144 = vmax.xlane.f32.xlu0 %v1143
        %v1145 = vpop.xlane.xlu0 %1144
        %v1146 = vmax.f32 %v1053, %v1054
        %1147 = vmax.xlane.f32.xlu0 %v1146
        %v1148 = vpop.xlane.xlu0 %1147
        %v1149 = vmax.f32 %v1055, %v1056
        %1150 = vmax.xlane.f32.xlu0 %v1149
        %v1151 = vpop.xlane.xlu0 %1150
        %v1152 = vmax.f32 %v1057, %v1058
        %1153 = vmax.xlane.f32.xlu0 %v1152
        %v1154 = vpop.xlane.xlu0 %1153
        %v1155 = vsub.f32 %v995, %v1061
        %v1156 = vsub.f32 %v996, %v1061
        %v1157 = vsub.f32 %v997, %v1064
        %v1158 = vsub.f32 %v998, %v1064
        %v1159 = vsub.f32 %v999, %v1067
        %v1160 = vsub.f32 %v1000, %v1067
        %v1161 = vsub.f32 %v1001, %v1070
        %v1162 = vsub.f32 %v1002, %v1070
        %v1163 = vsub.f32 %v1003, %v1073
        %v1164 = vsub.f32 %v1004, %v1073
        %v1165 = vsub.f32 %v1005, %v1076
        %v1166 = vsub.f32 %v1006, %v1076
        %v1167 = vsub.f32 %v1007, %v1079
        %v1168 = vsub.f32 %v1008, %v1079
        %v1169 = vsub.f32 %v1009, %v1082
        %v1170 = vsub.f32 %v1010, %v1082
        %v1171 = vsub.f32 %v1011, %v1085
        %v1172 = vsub.f32 %v1012, %v1085
        %v1173 = vsub.f32 %v1013, %v1088
        %v1174 = vsub.f32 %v1014, %v1088
        %v1175 = vsub.f32 %v1015, %v1091
        %v1176 = vsub.f32 %v1016, %v1091
        %v1177 = vsub.f32 %v1017, %v1094
        %v1178 = vsub.f32 %v1018, %v1094
        %v1179 = vsub.f32 %v1019, %v1097
        %v1180 = vsub.f32 %v1020, %v1097
        %v1181 = vsub.f32 %v1021, %v1100
        %v1182 = vsub.f32 %v1022, %v1100
        %v1183 = vsub.f32 %v1023, %v1103
        %v1184 = vsub.f32 %v1024, %v1103
        %v1185 = vsub.f32 %v1025, %v1106
        %v1186 = vsub.f32 %v1026, %v1106
        %v1187 = vsub.f32 %v1027, %v1109
        %v1188 = vsub.f32 %v1028, %v1109
        %v1189 = vsub.f32 %v1029, %v1112
        %v1190 = vsub.f32 %v1030, %v1112
        %v1191 = vsub.f32 %v1031, %v1115
        %v1192 = vsub.f32 %v1032, %v1115
        %v1193 = vsub.f32 %v1033, %v1118
        %v1194 = vsub.f32 %v1034, %v1118
        %v1195 = vsub.f32 %v1035, %v1121
        %v1196 = vsub.f32 %v1036, %v1121
        %v1197 = vsub.f32 %v1037, %v1124
        %v1198 = vsub.f32 %v1038, %v1124
        %v1199 = vsub.f32 %v1039, %v1127
        %v1200 = vsub.f32 %v1040, %v1127
        %v1201 = vsub.f32 %v1041, %v1130
        %v1202 = vsub.f32 %v1042, %v1130
        %v1203 = vsub.f32 %v1043, %v1133
        %v1204 = vsub.f32 %v1044, %v1133
        %v1205 = vsub.f32 %v1045, %v1136
        %v1206 = vsub.f32 %v1046, %v1136
        %v1207 = vsub.f32 %v1047, %v1139
        %v1208 = vsub.f32 %v1048, %v1139
        %v1209 = vsub.f32 %v1049, %v1142
        %v1210 = vsub.f32 %v1050, %v1142
        %v1211 = vsub.f32 %v1051, %v1145
        %v1212 = vsub.f32 %v1052, %v1145
        %v1213 = vsub.f32 %v1053, %v1148
        %v1214 = vsub.f32 %v1054, %v1148
        %v1215 = vsub.f32 %v1055, %v1151
        %v1216 = vsub.f32 %v1056, %v1151
        %v1217 = vsub.f32 %v1057, %v1154
        %v1218 = vsub.f32 %v1058, %v1154
        %v1219 = vmul.f32 %v1155, 1.442695
        %v1220 = vpow.pop %v1219
        %v1221 = vmul.f32 %v1156, 1.442695
        %v1222 = vpow.pop %v1221
        %v1223 = vmul.f32 %v1157, 1.442695
        %v1224 = vpow.pop %v1223
        %v1225 = vmul.f32 %v1158, 1.442695
        %v1226 = vpow.pop %v1225
        %v1227 = vmul.f32 %v1159, 1.442695
        %v1228 = vpow.pop %v1227
        %v1229 = vmul.f32 %v1160, 1.442695
        %v1230 = vpow.pop %v1229
        %v1231 = vmul.f32 %v1161, 1.442695
        %v1232 = vpow.pop %v1231
        %v1233 = vmul.f32 %v1162, 1.442695
        %v1234 = vpow.pop %v1233
        %v1235 = vmul.f32 %v1163, 1.442695
        %v1236 = vpow.pop %v1235
        %v1237 = vmul.f32 %v1164, 1.442695
        %v1238 = vpow.pop %v1237
        %v1239 = vmul.f32 %v1165, 1.442695
        %v1240 = vpow.pop %v1239
        %v1241 = vmul.f32 %v1166, 1.442695
        %v1242 = vpow.pop %v1241
        %v1243 = vmul.f32 %v1167, 1.442695
        %v1244 = vpow.pop %v1243
        %v1245 = vmul.f32 %v1168, 1.442695
        %v1246 = vpow.pop %v1245
        %v1247 = vmul.f32 %v1169, 1.442695
        %v1248 = vpow.pop %v1247
        %v1249 = vmul.f32 %v1170, 1.442695
        %v1250 = vpow.pop %v1249
        %v1251 = vmul.f32 %v1171, 1.442695
        %v1252 = vpow.pop %v1251
        %v1253 = vmul.f32 %v1172, 1.442695
        %v1254 = vpow.pop %v1253
        %v1255 = vmul.f32 %v1173, 1.442695
        %v1256 = vpow.pop %v1255
        %v1257 = vmul.f32 %v1174, 1.442695
        %v1258 = vpow.pop %v1257
        %v1259 = vmul.f32 %v1175, 1.442695
        %v1260 = vpow.pop %v1259
        %v1261 = vmul.f32 %v1176, 1.442695
        %v1262 = vpow.pop %v1261
        %v1263 = vmul.f32 %v1177, 1.442695
        %v1264 = vpow.pop %v1263
        %v1265 = vmul.f32 %v1178, 1.442695
        %v1266 = vpow.pop %v1265
        %v1267 = vmul.f32 %v1179, 1.442695
        %v1268 = vpow.pop %v1267
        %v1269 = vmul.f32 %v1180, 1.442695
        %v1270 = vpow.pop %v1269
        %v1271 = vmul.f32 %v1181, 1.442695
        %v1272 = vpow.pop %v1271
        %v1273 = vmul.f32 %v1182, 1.442695
        %v1274 = vpow.pop %v1273
        %v1275 = vmul.f32 %v1183, 1.442695
        %v1276 = vpow.pop %v1275
        %v1277 = vmul.f32 %v1184, 1.442695
        %v1278 = vpow.pop %v1277
        %v1279 = vmul.f32 %v1185, 1.442695
        %v1280 = vpow.pop %v1279
        %v1281 = vmul.f32 %v1186, 1.442695
        %v1282 = vpow.pop %v1281
        %v1283 = vmul.f32 %v1187, 1.442695
        %v1284 = vpow.pop %v1283
        %v1285 = vmul.f32 %v1188, 1.442695
        %v1286 = vpow.pop %v1285
        %v1287 = vmul.f32 %v1189, 1.442695
        %v1288 = vpow.pop %v1287
        %v1289 = vmul.f32 %v1190, 1.442695
        %v1290 = vpow.pop %v1289
        %v1291 = vmul.f32 %v1191, 1.442695
        %v1292 = vpow.pop %v1291
        %v1293 = vmul.f32 %v1192, 1.442695
        %v1294 = vpow.pop %v1293
        %v1295 = vmul.f32 %v1193, 1.442695
        %v1296 = vpow.pop %v1295
        %v1297 = vmul.f32 %v1194, 1.442695
        %v1298 = vpow.pop %v1297
        %v1299 = vmul.f32 %v1195, 1.442695
        %v1300 = vpow.pop %v1299
        %v1301 = vmul.f32 %v1196, 1.442695
        %v1302 = vpow.pop %v1301
        %v1303 = vmul.f32 %v1197, 1.442695
        %v1304 = vpow.pop %v1303
        %v1305 = vmul.f32 %v1198, 1.442695
        %v1306 = vpow.pop %v1305
        %v1307 = vmul.f32 %v1199, 1.442695
        %v1308 = vpow.pop %v1307
        %v1309 = vmul.f32 %v1200, 1.442695
        %v1310 = vpow.pop %v1309
        %v1311 = vmul.f32 %v1201, 1.442695
        %v1312 = vpow.pop %v1311
        %v1313 = vmul.f32 %v1202, 1.442695
        %v1314 = vpow.pop %v1313
        %v1315 = vmul.f32 %v1203, 1.442695
        %v1316 = vpow.pop %v1315
        %v1317 = vmul.f32 %v1204, 1.442695
        %v1318 = vpow.pop %v1317
        %v1319 = vmul.f32 %v1205, 1.442695
        %v1320 = vpow.pop %v1319
        %v1321 = vmul.f32 %v1206, 1.442695
        %v1322 = vpow.pop %v1321
        %v1323 = vmul.f32 %v1207, 1.442695
        %v1324 = vpow.pop %v1323
        %v1325 = vmul.f32 %v1208, 1.442695
        %v1326 = vpow.pop %v1325
        %v1327 = vmul.f32 %v1209, 1.442695
        %v1328 = vpow.pop %v1327
        %v1329 = vmul.f32 %v1210, 1.442695
        %v1330 = vpow.pop %v1329
        %v1331 = vmul.f32 %v1211, 1.442695
        %v1332 = vpow.pop %v1331
        %v1333 = vmul.f32 %v1212, 1.442695
        %v1334 = vpow.pop %v1333
        %v1335 = vmul.f32 %v1213, 1.442695
        %v1336 = vpow.pop %v1335
        %v1337 = vmul.f32 %v1214, 1.442695
        %v1338 = vpow.pop %v1337
        %v1339 = vmul.f32 %v1215, 1.442695
        %v1340 = vpow.pop %v1339
        %v1341 = vmul.f32 %v1216, 1.442695
        %v1342 = vpow.pop %v1341
        %v1343 = vmul.f32 %v1217, 1.442695
        %v1344 = vpow.pop %v1343
        %v1345 = vmul.f32 %v1218, 1.442695
        %v1346 = vpow.pop %v1345
        %v1347 = vadd.f32 %v1220, %v1222
        %1348 = vadd.xlane.f32.xlu0 %v1347
        %v1349 = vpop.xlane.xlu0 %1348
        %v1350 = vadd.f32 %v1224, %v1226
        %1351 = vadd.xlane.f32.xlu0 %v1350
        %v1352 = vpop.xlane.xlu0 %1351
        %v1353 = vadd.f32 %v1228, %v1230
        %1354 = vadd.xlane.f32.xlu0 %v1353
        %v1355 = vpop.xlane.xlu0 %1354
        %v1356 = vadd.f32 %v1232, %v1234
        %1357 = vadd.xlane.f32.xlu0 %v1356
        %v1358 = vpop.xlane.xlu0 %1357
        %v1359 = vadd.f32 %v1236, %v1238
        %1360 = vadd.xlane.f32.xlu0 %v1359
        %v1361 = vpop.xlane.xlu0 %1360
        %v1362 = vadd.f32 %v1240, %v1242
        %1363 = vadd.xlane.f32.xlu0 %v1362
        %v1364 = vpop.xlane.xlu0 %1363
        %v1365 = vadd.f32 %v1244, %v1246
        %1366 = vadd.xlane.f32.xlu0 %v1365
        %v1367 = vpop.xlane.xlu0 %1366
        %v1368 = vadd.f32 %v1248, %v1250
        %1369 = vadd.xlane.f32.xlu0 %v1368
        %v1370 = vpop.xlane.xlu0 %1369
        %v1371 = vadd.f32 %v1252, %v1254
        %1372 = vadd.xlane.f32.xlu0 %v1371
        %v1373 = vpop.xlane.xlu0 %1372
        %v1374 = vadd.f32 %v1256, %v1258
        %1375 = vadd.xlane.f32.xlu0 %v1374
        %v1376 = vpop.xlane.xlu0 %1375
        %v1377 = vadd.f32 %v1260, %v1262
        %1378 = vadd.xlane.f32.xlu0 %v1377
        %v1379 = vpop.xlane.xlu0 %1378
        %v1380 = vadd.f32 %v1264, %v1266
        %1381 = vadd.xlane.f32.xlu0 %v1380
        %v1382 = vpop.xlane.xlu0 %1381
        %v1383 = vadd.f32 %v1268, %v1270
        %1384 = vadd.xlane.f32.xlu0 %v1383
        %v1385 = vpop.xlane.xlu0 %1384
        %v1386 = vadd.f32 %v1272, %v1274
        %1387 = vadd.xlane.f32.xlu0 %v1386
        %v1388 = vpop.xlane.xlu0 %1387
        %v1389 = vadd.f32 %v1276, %v1278
        %1390 = vadd.xlane.f32.xlu0 %v1389
        %v1391 = vpop.xlane.xlu0 %1390
        %v1392 = vadd.f32 %v1280, %v1282
        %1393 = vadd.xlane.f32.xlu0 %v1392
        %v1394 = vpop.xlane.xlu0 %1393
        %v1395 = vadd.f32 %v1284, %v1286
        %1396 = vadd.xlane.f32.xlu0 %v1395
        %v1397 = vpop.xlane.xlu0 %1396
        %v1398 = vadd.f32 %v1288, %v1290
        %1399 = vadd.xlane.f32.xlu0 %v1398
        %v1400 = vpop.xlane.xlu0 %1399
        %v1401 = vadd.f32 %v1292, %v1294
        %1402 = vadd.xlane.f32.xlu0 %v1401
        %v1403 = vpop.xlane.xlu0 %1402
        %v1404 = vadd.f32 %v1296, %v1298
        %1405 = vadd.xlane.f32.xlu0 %v1404
        %v1406 = vpop.xlane.xlu0 %1405
        %v1407 = vadd.f32 %v1300, %v1302
        %1408 = vadd.xlane.f32.xlu0 %v1407
        %v1409 = vpop.xlane.xlu0 %1408
        %v1410 = vadd.f32 %v1304, %v1306
        %1411 = vadd.xlane.f32.xlu0 %v1410
        %v1412 = vpop.xlane.xlu0 %1411
        %v1413 = vadd.f32 %v1308, %v1310
        %1414 = vadd.xlane.f32.xlu0 %v1413
        %v1415 = vpop.xlane.xlu0 %1414
        %v1416 = vadd.f32 %v1312, %v1314
        %1417 = vadd.xlane.f32.xlu0 %v1416
        %v1418 = vpop.xlane.xlu0 %1417
        %v1419 = vadd.f32 %v1316, %v1318
        %1420 = vadd.xlane.f32.xlu0 %v1419
        %v1421 = vpop.xlane.xlu0 %1420
        %v1422 = vadd.f32 %v1320, %v1322
        %1423 = vadd.xlane.f32.xlu0 %v1422
        %v1424 = vpop.xlane.xlu0 %1423
        %v1425 = vadd.f32 %v1324, %v1326
        %1426 = vadd.xlane.f32.xlu0 %v1425
        %v1427 = vpop.xlane.xlu0 %1426
        %v1428 = vadd.f32 %v1328, %v1330
        %1429 = vadd.xlane.f32.xlu0 %v1428
        %v1430 = vpop.xlane.xlu0 %1429
        %v1431 = vadd.f32 %v1332, %v1334
        %1432 = vadd.xlane.f32.xlu0 %v1431
        %v1433 = vpop.xlane.xlu0 %1432
        %v1434 = vadd.f32 %v1336, %v1338
        %1435 = vadd.xlane.f32.xlu0 %v1434
        %v1436 = vpop.xlane.xlu0 %1435
        %v1437 = vadd.f32 %v1340, %v1342
        %1438 = vadd.xlane.f32.xlu0 %v1437
        %v1439 = vpop.xlane.xlu0 %1438
        %v1440 = vadd.f32 %v1344, %v1346
        %1441 = vadd.xlane.f32.xlu0 %v1440
        %v1442 = vpop.xlane.xlu0 %1441
        %v1443 = vrcp.pop %v1349
        %v1444 = vmul.f32 %v1220, %v1443
        %v1445 = vmul.f32 %v1222, %v1443
        %v1446 = vrcp.pop %v1352
        %v1447 = vmul.f32 %v1224, %v1446
        %v1448 = vmul.f32 %v1226, %v1446
        %v1449 = vrcp.pop %v1355
        %v1450 = vmul.f32 %v1228, %v1449
        %v1451 = vmul.f32 %v1230, %v1449
        %v1452 = vrcp.pop %v1358
        %v1453 = vmul.f32 %v1232, %v1452
        %v1454 = vmul.f32 %v1234, %v1452
        %v1455 = vrcp.pop %v1361
        %v1456 = vmul.f32 %v1236, %v1455
        %v1457 = vmul.f32 %v1238, %v1455
        %v1458 = vrcp.pop %v1364
        %v1459 = vmul.f32 %v1240, %v1458
        %v1460 = vmul.f32 %v1242, %v1458
        %v1461 = vrcp.pop %v1367
        %v1462 = vmul.f32 %v1244, %v1461
        %v1463 = vmul.f32 %v1246, %v1461
        %v1464 = vrcp.pop %v1370
        %v1465 = vmul.f32 %v1248, %v1464
        %v1466 = vmul.f32 %v1250, %v1464
        %v1467 = vrcp.pop %v1373
        %v1468 = vmul.f32 %v1252, %v1467
        %v1469 = vmul.f32 %v1254, %v1467
        %v1470 = vrcp.pop %v1376
        %v1471 = vmul.f32 %v1256, %v1470
        %v1472 = vmul.f32 %v1258, %v1470
        %v1473 = vrcp.pop %v1379
        %v1474 = vmul.f32 %v1260, %v1473
        %v1475 = vmul.f32 %v1262, %v1473
        %v1476 = vrcp.pop %v1382
        %v1477 = vmul.f32 %v1264, %v1476
        %v1478 = vmul.f32 %v1266, %v1476
        %v1479 = vrcp.pop %v1385
        %v1480 = vmul.f32 %v1268, %v1479
        %v1481 = vmul.f32 %v1270, %v1479
        %v1482 = vrcp.pop %v1388
        %v1483 = vmul.f32 %v1272, %v1482
        %v1484 = vmul.f32 %v1274, %v1482
        %v1485 = vrcp.pop %v1391
        %v1486 = vmul.f32 %v1276, %v1485
        %v1487 = vmul.f32 %v1278, %v1485
        %v1488 = vrcp.pop %v1394
        %v1489 = vmul.f32 %v1280, %v1488
        %v1490 = vmul.f32 %v1282, %v1488
        %v1491 = vrcp.pop %v1397
        %v1492 = vmul.f32 %v1284, %v1491
        %v1493 = vmul.f32 %v1286, %v1491
        %v1494 = vrcp.pop %v1400
        %v1495 = vmul.f32 %v1288, %v1494
        %v1496 = vmul.f32 %v1290, %v1494
        %v1497 = vrcp.pop %v1403
        %v1498 = vmul.f32 %v1292, %v1497
        %v1499 = vmul.f32 %v1294, %v1497
        %v1500 = vrcp.pop %v1406
        %v1501 = vmul.f32 %v1296, %v1500
        %v1502 = vmul.f32 %v1298, %v1500
        %v1503 = vrcp.pop %v1409
        %v1504 = vmul.f32 %v1300, %v1503
        %v1505 = vmul.f32 %v1302, %v1503
        %v1506 = vrcp.pop %v1412
        %v1507 = vmul.f32 %v1304, %v1506
        %v1508 = vmul.f32 %v1306, %v1506
        %v1509 = vrcp.pop %v1415
        %v1510 = vmul.f32 %v1308, %v1509
        %v1511 = vmul.f32 %v1310, %v1509
        %v1512 = vrcp.pop %v1418
        %v1513 = vmul.f32 %v1312, %v1512
        %v1514 = vmul.f32 %v1314, %v1512
        %v1515 = vrcp.pop %v1421
        %v1516 = vmul.f32 %v1316, %v1515
        %v1517 = vmul.f32 %v1318, %v1515
        %v1518 = vrcp.pop %v1424
        %v1519 = vmul.f32 %v1320, %v1518
        %v1520 = vmul.f32 %v1322, %v1518
        %v1521 = vrcp.pop %v1427
        %v1522 = vmul.f32 %v1324, %v1521
        %v1523 = vmul.f32 %v1326, %v1521
        %v1524 = vrcp.pop %v1430
        %v1525 = vmul.f32 %v1328, %v1524
        %v1526 = vmul.f32 %v1330, %v1524
        %v1527 = vrcp.pop %v1433
        %v1528 = vmul.f32 %v1332, %v1527
        %v1529 = vmul.f32 %v1334, %v1527
        %v1530 = vrcp.pop %v1436
        %v1531 = vmul.f32 %v1336, %v1530
        %v1532 = vmul.f32 %v1338, %v1530
        %v1533 = vrcp.pop %v1439
        %v1534 = vmul.f32 %v1340, %v1533
        %v1535 = vmul.f32 %v1342, %v1533
        %v1536 = vrcp.pop %v1442
        %v1537 = vmul.f32 %v1344, %v1536
        %v1538 = vmul.f32 %v1346, %v1536
        %v1539 = vpack.c.bf16 %v1447, %v1444
        %v1540 = vpack.c.bf16 %v1448, %v1445
        %v1541 = vpack.c.bf16 %v1453, %v1450
        %v1542 = vpack.c.bf16 %v1454, %v1451
        %v1543 = vpack.c.bf16 %v1459, %v1456
        %v1544 = vpack.c.bf16 %v1460, %v1457
        %v1545 = vpack.c.bf16 %v1465, %v1462
        %v1546 = vpack.c.bf16 %v1466, %v1463
        %v1547 = vpack.c.bf16 %v1471, %v1468
        %v1548 = vpack.c.bf16 %v1472, %v1469
        %v1549 = vpack.c.bf16 %v1477, %v1474
        %v1550 = vpack.c.bf16 %v1478, %v1475
        %v1551 = vpack.c.bf16 %v1483, %v1480
        %v1552 = vpack.c.bf16 %v1484, %v1481
        %v1553 = vpack.c.bf16 %v1489, %v1486
        %v1554 = vpack.c.bf16 %v1490, %v1487
        %v1555 = vpack.c.bf16 %v1495, %v1492
        %v1556 = vpack.c.bf16 %v1496, %v1493
        %v1557 = vpack.c.bf16 %v1501, %v1498
        %v1558 = vpack.c.bf16 %v1502, %v1499
        %v1559 = vpack.c.bf16 %v1507, %v1504
        %v1560 = vpack.c.bf16 %v1508, %v1505
        %v1561 = vpack.c.bf16 %v1513, %v1510
        %v1562 = vpack.c.bf16 %v1514, %v1511
        %v1563 = vpack.c.bf16 %v1519, %v1516
        %v1564 = vpack.c.bf16 %v1520, %v1517
        %v1565 = vpack.c.bf16 %v1525, %v1522
        %v1566 = vpack.c.bf16 %v1526, %v1523
        %v1567 = vpack.c.bf16 %v1531, %v1528
        %v1568 = vpack.c.bf16 %v1532, %v1529
        %v1569 = vpack.c.bf16 %v1537, %v1534
        %v1570 = vpack.c.bf16 %v1538, %v1535
        %v1603 = vunpack.c.l.b16 %v379
        %v1604 = vunpack.c.l.b16 %v380
        %v1605 = vunpack.c.l.b16 %v381
        %v1606 = vunpack.c.l.b16 %v382
        %v1607 = vunpack.c.l.b16 %v383
        %v1608 = vunpack.c.l.b16 %v384
        %v1609 = vunpack.c.l.b16 %v385
        %v1610 = vunpack.c.l.b16 %v386
        %v1611 = vunpack.c.l.b16 %v387
        %v1612 = vunpack.c.l.b16 %v388
        %v1613 = vunpack.c.l.b16 %v389
        %v1614 = vunpack.c.l.b16 %v390
        %v1615 = vunpack.c.l.b16 %v391
        %v1616 = vunpack.c.l.b16 %v392
        %v1617 = vunpack.c.l.b16 %v393
        %v1618 = vunpack.c.l.b16 %v394
        %v1619 = vunpack.c.l.b16 %v395
        %v1620 = vunpack.c.l.b16 %v396
        %v1621 = vunpack.c.l.b16 %v397
        %v1622 = vunpack.c.l.b16 %v398
        %v1623 = vunpack.c.l.b16 %v399
        %v1624 = vunpack.c.l.b16 %v400
        %v1625 = vunpack.c.l.b16 %v401
        %v1626 = vunpack.c.l.b16 %v402
        %v1627 = vunpack.c.l.b16 %v403
        %v1628 = vunpack.c.l.b16 %v404
        %v1629 = vunpack.c.l.b16 %v405
        %v1630 = vunpack.c.l.b16 %v406
        %v1631 = vunpack.c.l.b16 %v407
        %v1632 = vunpack.c.l.b16 %v408
        %v1633 = vunpack.c.l.b16 %v409
        %v1634 = vunpack.c.l.b16 %v410
        %v1635 = vpack.c.b16 %v1604, %v1603
        %v1636 = vpack.c.b16 %v1606, %v1605
        %v1637 = vpack.c.b16 %v1608, %v1607
        %v1638 = vpack.c.b16 %v1610, %v1609
        %v1639 = vpack.c.b16 %v1612, %v1611
        %v1640 = vpack.c.b16 %v1614, %v1613
        %v1641 = vpack.c.b16 %v1616, %v1615
        %v1642 = vpack.c.b16 %v1618, %v1617
        %v1643 = vpack.c.b16 %v1620, %v1619
        %v1644 = vpack.c.b16 %v1622, %v1621
        %v1645 = vpack.c.b16 %v1624, %v1623
        %v1646 = vpack.c.b16 %v1626, %v1625
        %v1647 = vpack.c.b16 %v1628, %v1627
        %v1648 = vpack.c.b16 %v1630, %v1629
        %v1649 = vpack.c.b16 %v1632, %v1631
        %v1650 = vpack.c.b16 %v1634, %v1633
        %1667 = vmatprep.subr.bf16.mxu0 0
        %1668 = vmatpush1.bf16.msra.mxu0 %v1642
        %1669 = vmatprep.subr.bf16.mxu0 0
        %1670 = vmatpush1.bf16.msra.mxu0 %v1641
        %1671 = vmatprep.subr.bf16.mxu0 0
        %1672 = vmatpush1.bf16.msra.mxu0 %v1640
        %1673 = vmatprep.subr.bf16.mxu0 0
        %1674 = vmatpush1.bf16.msra.mxu0 %v1639
        %1675 = vmatprep.subr.bf16.mxu0 0
        %1676 = vmatpush1.bf16.msra.mxu0 %v1638
        %1677 = vmatprep.subr.bf16.mxu0 0
        %1678 = vmatpush1.bf16.msra.mxu0 %v1637
        %1679 = vmatprep.subr.bf16.mxu0 0
        %1680 = vmatpush1.bf16.msra.mxu0 %v1636
        %1681 = vmatprep.subr.bf16.mxu0 0
        %1682 = vmatpush1.bf16.msra.mxu0 %v1635
        %1683 = vmatprep.subr.bf16.mxu0 0
        %1684 = vmatpush2.bf16.msra.mxu0 %v1650
        %1685 = vmatprep.subr.bf16.mxu0 0
        %1686 = vmatpush2.bf16.msra.mxu0 %v1649
        %1687 = vmatprep.subr.bf16.mxu0 0
        %1688 = vmatpush2.bf16.msra.mxu0 %v1648
        %1689 = vmatprep.subr.bf16.mxu0 0
        %1690 = vmatpush2.bf16.msra.mxu0 %v1647
        %1691 = vmatprep.subr.bf16.mxu0 0
        %1692 = vmatpush2.bf16.msra.mxu0 %v1646
        %1693 = vmatprep.subr.bf16.mxu0 0
        %1694 = vmatpush2.bf16.msra.mxu0 %v1645
        %1695 = vmatprep.subr.bf16.mxu0 0
        %1696 = vmatpush2.bf16.msra.mxu0 %v1644
        %1697 = vmatprep.subr.bf16.mxu0 0
        %1698 = vmatpush2.bf16.msra.mxu0 %v1643
        %1699 = vmatprep.mubr.bf16.mxu0 %v1540
        %1700 = vmatmul.mubr.bf16.gmra.mxu0 %v1539
        %v1701 = vpop.f32.mrf.mxu0
        %v1702 = vadd.f32 0.0, %v1701
        %v1703 = vpop.f32.mrf.mxu0
        %v1704 = vpop.f32.mrf.mxu0
        %v1705 = vadd.f32 0.0, %v1704
        %v1706 = vpop.f32.mrf.mxu0
        %1707 = vmatprep.mubr.bf16.mxu0 %v1542
        %1708 = vmatmul.mubr.bf16.gmra.mxu0 %v1541
        %v1709 = vpop.f32.mrf.mxu0
        %v1710 = vadd.f32 0.0, %v1709
        %v1711 = vpop.f32.mrf.mxu0
        %v1712 = vpop.f32.mrf.mxu0
        %v1713 = vadd.f32 0.0, %v1712
        %v1714 = vpop.f32.mrf.mxu0
        %1715 = vmatprep.mubr.bf16.mxu0 %v1544
        %1716 = vmatmul.mubr.bf16.gmra.mxu0 %v1543
        %v1717 = vpop.f32.mrf.mxu0
        %v1718 = vadd.f32 0.0, %v1717
        %v1719 = vpop.f32.mrf.mxu0
        %v1720 = vpop.f32.mrf.mxu0
        %v1721 = vadd.f32 0.0, %v1720
        %v1722 = vpop.f32.mrf.mxu0
        %1723 = vmatprep.mubr.bf16.mxu0 %v1546
        %1724 = vmatmul.mubr.bf16.gmra.mxu0 %v1545
        %v1725 = vpop.f32.mrf.mxu0
        %v1726 = vadd.f32 0.0, %v1725
        %v1727 = vpop.f32.mrf.mxu0
        %v1728 = vpop.f32.mrf.mxu0
        %v1729 = vadd.f32 0.0, %v1728
        %v1730 = vpop.f32.mrf.mxu0
        %1731 = vmatprep.mubr.bf16.mxu0 %v1548
        %1732 = vmatmul.mubr.bf16.gmra.mxu0 %v1547
        %v1733 = vpop.f32.mrf.mxu0
        %v1734 = vadd.f32 0.0, %v1733
        %v1735 = vpop.f32.mrf.mxu0
        %v1736 = vpop.f32.mrf.mxu0
        %v1737 = vadd.f32 0.0, %v1736
        %v1738 = vpop.f32.mrf.mxu0
        %1739 = vmatprep.mubr.bf16.mxu0 %v1550
        %1740 = vmatmul.mubr.bf16.gmra.mxu0 %v1549
        %v1741 = vpop.f32.mrf.mxu0
        %v1742 = vadd.f32 0.0, %v1741
        %v1743 = vpop.f32.mrf.mxu0
        %v1744 = vpop.f32.mrf.mxu0
        %v1745 = vadd.f32 0.0, %v1744
        %v1746 = vpop.f32.mrf.mxu0
        %1747 = vmatprep.mubr.bf16.mxu0 %v1552
        %1748 = vmatmul.mubr.bf16.gmra.mxu0 %v1551
        %v1749 = vpop.f32.mrf.mxu0
        %v1750 = vadd.f32 0.0, %v1749
        %v1751 = vpop.f32.mrf.mxu0
        %v1752 = vpop.f32.mrf.mxu0
        %v1753 = vadd.f32 0.0, %v1752
        %v1754 = vpop.f32.mrf.mxu0
        %1755 = vmatprep.mubr.bf16.mxu0 %v1554
        %1756 = vmatmul.mubr.bf16.gmra.mxu0 %v1553
        %v1757 = vpop.f32.mrf.mxu0
        %v1758 = vadd.f32 0.0, %v1757
        %v1759 = vpop.f32.mrf.mxu0
        %v1760 = vpop.f32.mrf.mxu0
        %v1761 = vadd.f32 0.0, %v1760
        %v1762 = vpop.f32.mrf.mxu0
        %1763 = vmatprep.mubr.bf16.mxu0 %v1556
        %1764 = vmatmul.mubr.bf16.gmra.mxu0 %v1555
        %v1765 = vpop.f32.mrf.mxu0
        %v1766 = vadd.f32 0.0, %v1765
        %v1767 = vpop.f32.mrf.mxu0
        %v1768 = vpop.f32.mrf.mxu0
        %v1769 = vadd.f32 0.0, %v1768
        %v1770 = vpop.f32.mrf.mxu0
        %1771 = vmatprep.mubr.bf16.mxu0 %v1558
        %1772 = vmatmul.mubr.bf16.gmra.mxu0 %v1557
        %v1773 = vpop.f32.mrf.mxu0
        %v1774 = vadd.f32 0.0, %v1773
        %v1775 = vpop.f32.mrf.mxu0
        %v1776 = vpop.f32.mrf.mxu0
        %v1777 = vadd.f32 0.0, %v1776
        %v1778 = vpop.f32.mrf.mxu0
        %1779 = vmatprep.mubr.bf16.mxu0 %v1560
        %1780 = vmatmul.mubr.bf16.gmra.mxu0 %v1559
        %v1781 = vpop.f32.mrf.mxu0
        %v1782 = vadd.f32 0.0, %v1781
        %v1783 = vpop.f32.mrf.mxu0
        %v1784 = vpop.f32.mrf.mxu0
        %v1785 = vadd.f32 0.0, %v1784
        %v1786 = vpop.f32.mrf.mxu0
        %1787 = vmatprep.mubr.bf16.mxu0 %v1562
        %1788 = vmatmul.mubr.bf16.gmra.mxu0 %v1561
        %v1789 = vpop.f32.mrf.mxu0
        %v1790 = vadd.f32 0.0, %v1789
        %v1791 = vpop.f32.mrf.mxu0
        %v1792 = vpop.f32.mrf.mxu0
        %v1793 = vadd.f32 0.0, %v1792
        %v1794 = vpop.f32.mrf.mxu0
        %1795 = vmatprep.mubr.bf16.mxu0 %v1564
        %1796 = vmatmul.mubr.bf16.gmra.mxu0 %v1563
        %v1797 = vpop.f32.mrf.mxu0
        %v1798 = vadd.f32 0.0, %v1797
        %v1799 = vpop.f32.mrf.mxu0
        %v1800 = vpop.f32.mrf.mxu0
        %v1801 = vadd.f32 0.0, %v1800
        %v1802 = vpop.f32.mrf.mxu0
        %1803 = vmatprep.mubr.bf16.mxu0 %v1566
        %1804 = vmatmul.mubr.bf16.gmra.mxu0 %v1565
        %v1805 = vpop.f32.mrf.mxu0
        %v1806 = vadd.f32 0.0, %v1805
        %v1807 = vpop.f32.mrf.mxu0
        %v1808 = vpop.f32.mrf.mxu0
        %v1809 = vadd.f32 0.0, %v1808
        %v1810 = vpop.f32.mrf.mxu0
        %1811 = vmatprep.mubr.bf16.mxu0 %v1568
        %1812 = vmatmul.mubr.bf16.gmra.mxu0 %v1567
        %v1813 = vpop.f32.mrf.mxu0
        %v1814 = vadd.f32 0.0, %v1813
        %v1815 = vpop.f32.mrf.mxu0
        %v1816 = vpop.f32.mrf.mxu0
        %v1817 = vadd.f32 0.0, %v1816
        %v1818 = vpop.f32.mrf.mxu0
        %1819 = vmatprep.mubr.bf16.mxu0 %v1570
        %1820 = vmatmul.mubr.bf16.gmra.mxu0 %v1569
        %v1821 = vpop.f32.mrf.mxu0
        %v1822 = vadd.f32 0.0, %v1821
        %v1823 = vpop.f32.mrf.mxu0
        %v1824 = vpop.f32.mrf.mxu0
        %v1825 = vadd.f32 0.0, %v1824
        %v1826 = vpop.f32.mrf.mxu0
        %1827 = vdwg.mxu0
        %1828 = vst [vmem:[%s251] sm:$0xff] %v1702
        %1829 = vst [vmem:[%s251 + $0x8] sm:$0xff] %v1705
        %1830 = vst [vmem:[%s251 + $0x10] sm:$0xff] %v1710
        %1831 = vst [vmem:[%s251 + $0x18] sm:$0xff] %v1713
        %1832 = vst [vmem:[%s251 + $0x20] sm:$0xff] %v1718
        %1833 = vst [vmem:[%s251 + $0x28] sm:$0xff] %v1721
        %1834 = vst [vmem:[%s251 + $0x30] sm:$0xff] %v1726
        %1835 = vst [vmem:[%s251 + $0x38] sm:$0xff] %v1729
        %1836 = vst [vmem:[%s251 + $0x40] sm:$0xff] %v1734
        %1837 = vst [vmem:[%s251 + $0x48] sm:$0xff] %v1737
        %1838 = vst [vmem:[%s251 + $0x50] sm:$0xff] %v1742
        %1839 = vst [vmem:[%s251 + $0x58] sm:$0xff] %v1745
        %1840 = vst [vmem:[%s251 + $0x60] sm:$0xff] %v1750
        %1841 = vst [vmem:[%s251 + $0x68] sm:$0xff] %v1753
        %1842 = vst [vmem:[%s251 + $0x70] sm:$0xff] %v1758
        %1843 = vst [vmem:[%s251 + $0x78] sm:$0xff] %v1761
        %1844 = vst [vmem:[%s251 + $0x80] sm:$0xff] %v1766
        %1845 = vst [vmem:[%s251 + $0x88] sm:$0xff] %v1769
        %1846 = vst [vmem:[%s251 + $0x90] sm:$0xff] %v1774
        %1847 = vst [vmem:[%s251 + $0x98] sm:$0xff] %v1777
        %1848 = vst [vmem:[%s251 + $0xa0] sm:$0xff] %v1782
        %1849 = vst [vmem:[%s251 + $0xa8] sm:$0xff] %v1785
        %1850 = vst [vmem:[%s251 + $0xb0] sm:$0xff] %v1790
        %1851 = vst [vmem:[%s251 + $0xb8] sm:$0xff] %v1793
        %1852 = vst [vmem:[%s251 + $0xc0] sm:$0xff] %v1798
        %1853 = vst [vmem:[%s251 + $0xc8] sm:$0xff] %v1801
        %1854 = vst [vmem:[%s251 + $0xd0] sm:$0xff] %v1806
        %1855 = vst [vmem:[%s251 + $0xd8] sm:$0xff] %v1809
        %1856 = vst [vmem:[%s251 + $0xe0] sm:$0xff] %v1814
        %1857 = vst [vmem:[%s251 + $0xe8] sm:$0xff] %v1817
        %1858 = vst [vmem:[%s251 + $0xf0] sm:$0xff] %v1822
        %1859 = vst [vmem:[%s251 + $0xf8] sm:$0xff] %v1825
        %v1892 = vunpack.c.l.b16 %v1539
        %v1893 = vunpack.c.l.b16 %v1540
        %v1894 = vunpack.c.h.b16 %v1539
        %v1895 = vunpack.c.h.b16 %v1540
        %v1896 = vunpack.c.l.b16 %v1541
        %v1897 = vunpack.c.l.b16 %v1542
        %v1898 = vunpack.c.h.b16 %v1541
        %v1899 = vunpack.c.h.b16 %v1542
        %v1900 = vunpack.c.l.b16 %v1543
        %v1901 = vunpack.c.l.b16 %v1544
        %v1902 = vunpack.c.h.b16 %v1543
        %v1903 = vunpack.c.h.b16 %v1544
        %v1904 = vunpack.c.l.b16 %v1545
        %v1905 = vunpack.c.l.b16 %v1546
        %v1906 = vunpack.c.h.b16 %v1545
        %v1907 = vunpack.c.h.b16 %v1546
        %v1908 = vunpack.c.l.b16 %v1547
        %v1909 = vunpack.c.l.b16 %v1548
        %v1910 = vunpack.c.h.b16 %v1547
        %v1911 = vunpack.c.h.b16 %v1548
        %v1912 = vunpack.c.l.b16 %v1549
        %v1913 = vunpack.c.l.b16 %v1550
        %v1914 = vunpack.c.h.b16 %v1549
        %v1915 = vunpack.c.h.b16 %v1550
        %v1916 = vunpack.c.l.b16 %v1551
        %v1917 = vunpack.c.l.b16 %v1552
        %v1918 = vunpack.c.h.b16 %v1551
        %v1919 = vunpack.c.h.b16 %v1552
        %v1920 = vunpack.c.l.b16 %v1553
        %v1921 = vunpack.c.l.b16 %v1554
        %v1922 = vunpack.c.h.b16 %v1553
        %v1923 = vunpack.c.h.b16 %v1554
        %v1924 = vunpack.c.l.b16 %v1555
        %v1925 = vunpack.c.l.b16 %v1556
        %v1926 = vunpack.c.h.b16 %v1555
        %v1927 = vunpack.c.h.b16 %v1556
        %v1928 = vunpack.c.l.b16 %v1557
        %v1929 = vunpack.c.l.b16 %v1558
        %v1930 = vunpack.c.h.b16 %v1557
        %v1931 = vunpack.c.h.b16 %v1558
        %v1932 = vunpack.c.l.b16 %v1559
        %v1933 = vunpack.c.l.b16 %v1560
        %v1934 = vunpack.c.h.b16 %v1559
        %v1935 = vunpack.c.h.b16 %v1560
        %v1936 = vunpack.c.l.b16 %v1561
        %v1937 = vunpack.c.l.b16 %v1562
        %v1938 = vunpack.c.h.b16 %v1561
        %v1939 = vunpack.c.h.b16 %v1562
        %v1940 = vunpack.c.l.b16 %v1563
        %v1941 = vunpack.c.l.b16 %v1564
        %v1942 = vunpack.c.h.b16 %v1563
        %v1943 = vunpack.c.h.b16 %v1564
        %v1944 = vunpack.c.l.b16 %v1565
        %v1945 = vunpack.c.l.b16 %v1566
        %v1946 = vunpack.c.h.b16 %v1565
        %v1947 = vunpack.c.h.b16 %v1566
        %v1948 = vunpack.c.l.b16 %v1567
        %v1949 = vunpack.c.l.b16 %v1568
        %v1950 = vunpack.c.h.b16 %v1567
        %v1951 = vunpack.c.h.b16 %v1568
        %v1952 = vunpack.c.l.b16 %v1569
        %v1953 = vunpack.c.l.b16 %v1570
        %v1954 = vunpack.c.h.b16 %v1569
        %v1955 = vunpack.c.h.b16 %v1570
        %v1956 = vpack.c.b16 %v1893, %v1892
        %v1957 = vpack.c.b16 %v1895, %v1894
        %v1958 = vpack.c.b16 %v1897, %v1896
        %v1959 = vpack.c.b16 %v1899, %v1898
        %v1960 = vpack.c.b16 %v1901, %v1900
        %v1961 = vpack.c.b16 %v1903, %v1902
        %v1962 = vpack.c.b16 %v1905, %v1904
        %v1963 = vpack.c.b16 %v1907, %v1906
        %v1964 = vpack.c.b16 %v1909, %v1908
        %v1965 = vpack.c.b16 %v1911, %v1910
        %v1966 = vpack.c.b16 %v1913, %v1912
        %v1967 = vpack.c.b16 %v1915, %v1914
        %v1968 = vpack.c.b16 %v1917, %v1916
        %v1969 = vpack.c.b16 %v1919, %v1918
        %v1970 = vpack.c.b16 %v1921, %v1920
        %v1971 = vpack.c.b16 %v1923, %v1922
        %v1972 = vpack.c.b16 %v1925, %v1924
        %v1973 = vpack.c.b16 %v1927, %v1926
        %v1974 = vpack.c.b16 %v1929, %v1928
        %v1975 = vpack.c.b16 %v1931, %v1930
        %v1976 = vpack.c.b16 %v1933, %v1932
        %v1977 = vpack.c.b16 %v1935, %v1934
        %v1978 = vpack.c.b16 %v1937, %v1936
        %v1979 = vpack.c.b16 %v1939, %v1938
        %v1980 = vpack.c.b16 %v1941, %v1940
        %v1981 = vpack.c.b16 %v1943, %v1942
        %v1982 = vpack.c.b16 %v1945, %v1944
        %v1983 = vpack.c.b16 %v1947, %v1946
        %v1984 = vpack.c.b16 %v1949, %v1948
        %v1985 = vpack.c.b16 %v1951, %v1950
        %v1986 = vpack.c.b16 %v1953, %v1952
        %v1987 = vpack.c.b16 %v1955, %v1954
        %2020 = vst [vmem:[%s258] sm:$0xff] %v1956
        %2021 = vst [vmem:[%s258 + $0x8] sm:$0xff] %v1957
        %2022 = vst [vmem:[%s258 + $0x10] sm:$0xff] %v1958
        %2023 = vst [vmem:[%s258 + $0x18] sm:$0xff] %v1959
        %2024 = vst [vmem:[%s258 + $0x20] sm:$0xff] %v1960
        %2025 = vst [vmem:[%s258 + $0x28] sm:$0xff] %v1961
        %2026 = vst [vmem:[%s258 + $0x30] sm:$0xff] %v1962
        %2027 = vst [vmem:[%s258 + $0x38] sm:$0xff] %v1963
        %2028 = vst [vmem:[%s258 + $0x40] sm:$0xff] %v1964
        %2029 = vst [vmem:[%s258 + $0x48] sm:$0xff] %v1965
        %2030 = vst [vmem:[%s258 + $0x50] sm:$0xff] %v1966
        %2031 = vst [vmem:[%s258 + $0x58] sm:$0xff] %v1967
        %2032 = vst [vmem:[%s258 + $0x60] sm:$0xff] %v1968
        %2033 = vst [vmem:[%s258 + $0x68] sm:$0xff] %v1969
        %2034 = vst [vmem:[%s258 + $0x70] sm:$0xff] %v1970
        %2035 = vst [vmem:[%s258 + $0x78] sm:$0xff] %v1971
        %2036 = vst [vmem:[%s258 + $0x80] sm:$0xff] %v1972
        %2037 = vst [vmem:[%s258 + $0x88] sm:$0xff] %v1973
        %2038 = vst [vmem:[%s258 + $0x90] sm:$0xff] %v1974
        %2039 = vst [vmem:[%s258 + $0x98] sm:$0xff] %v1975
        %2040 = vst [vmem:[%s258 + $0xa0] sm:$0xff] %v1976
        %2041 = vst [vmem:[%s258 + $0xa8] sm:$0xff] %v1977
        %2042 = vst [vmem:[%s258 + $0xb0] sm:$0xff] %v1978
        %2043 = vst [vmem:[%s258 + $0xb8] sm:$0xff] %v1979
        %2044 = vst [vmem:[%s258 + $0xc0] sm:$0xff] %v1980
        %2045 = vst [vmem:[%s258 + $0xc8] sm:$0xff] %v1981
        %2046 = vst [vmem:[%s258 + $0xd0] sm:$0xff] %v1982
        %2047 = vst [vmem:[%s258 + $0xd8] sm:$0xff] %v1983
        %2048 = vst [vmem:[%s258 + $0xe0] sm:$0xff] %v1984
        %2049 = vst [vmem:[%s258 + $0xe8] sm:$0xff] %v1985
        %2050 = vst [vmem:[%s258 + $0xf0] sm:$0xff] %v1986
        %2051 = vst [vmem:[%s258 + $0xf8] sm:$0xff] %v1987
        %s2052 = sand.u32 %s124, 1
        %s2053 = scalar_lea.sflag [#allocation3], %s2052
        %s2054 = sand.u32 %s124, 1
        %s2055 = smul.addr %s2054, 256
        %s2056 = scalar_lea.vmem [#allocation2], %s2055
        %s2057 = sand.u32 %s152, 1
        %s2058 = scalar_lea.sflag [#allocation5], %s2057
        %s2059 = sand.u32 %s152, 1
        %s2060 = smul.addr %s2059, 256
        %s2061 = scalar_lea.vmem [#allocation4], %s2060
        // Predicated region
        $region33: #{tpu_custom_call.1} parent=31 // pred_check
          %p2062 = pneg %p134
        $region34: #{tpu_custom_call.1} parent=31 // pred_check_branch
          %2064 = sbr.rel (%p2062) target = $region36
        $region35: #{tpu_custom_call.1} parent=31 // pred_region
          %s2065 = smul.u32 32, %s27
          %s2067 = ssub.s32 4096, 4096
          %2068 = vsyncadd %s2053, %s2067
          %s2069 = smul.addr %s26, 32
          %s2070 = sadd.s32 %s2065, %s2069
          %s2071 = smul.addr %s2070, 128
          %s2072 = scalar_lea.hbm %s3, %s2071
          %s2073 = sshll.u32 %s2056, 4
          %s2074 = int_to_ptr.vmem [resolvable:$true] %s2073
          %2079 = dma.vmem_to_hbm [thread:$0]  %s2074, 4096, %s2072, %s2053, 128, 128, 8
        $region36: #{tpu_custom_call.1} parent=31 // pred_fallthru
          _
        // Predicated region
        $region37: #{tpu_custom_call.1} parent=31 // pred_check
          %p2080 = pneg %p162
        $region38: #{tpu_custom_call.1} parent=31 // pred_check_branch
          %2082 = sbr.rel (%p2080) target = $region40
        $region39: #{tpu_custom_call.1} parent=31 // pred_region
          %s2083 = smul.u32 32, %s27
          %s2085 = ssub.s32 4096, 4096
          %2086 = vsyncadd %s2058, %s2085
          %s2087 = smul.addr %s2083, 2
          %s2088 = smul.addr %s26, 64
          %s2089 = sadd.s32 %s2087, %s2088
          %s2090 = smul.addr %s2089, 64
          %s2091 = scalar_lea.hbm %s4, %s2090
          %s2092 = sshll.u32 %s2061, 4
          %s2093 = int_to_ptr.vmem [resolvable:$true] %s2092
          %2098 = dma.vmem_to_hbm [thread:$0]  %s2093, 4096, %s2091, %s2058, 128, 128, 8
        $region40: #{tpu_custom_call.1} parent=31 // pred_fallthru
          _
      $region32: #{tpu_custom_call.1} parent=5 // pred_fallthru
        _
      %p2099 = scmp.le.s32.totalorder 2, %s17
      // Predicated region
      $region41: #{tpu_custom_call.1} parent=5 // pred_check
        %p2100 = pneg %p2099
      $region42: #{tpu_custom_call.1} parent=5 // pred_check_branch
        %2102 = sbr.rel (%p2100) target = $region44
      $region43: #{tpu_custom_call.1} parent=5 // pred_region
        %s2103 = ssub.s32 %s17, 2
        // Predicated region
        $region45: #{tpu_custom_call.1} parent=43 // pred_check
          %p2104 = pneg %p140
        $region46: #{tpu_custom_call.1} parent=43 // pred_check_branch
          %2106 = sbr.rel (%p2104) target = $region48
        $region47: #{tpu_custom_call.1} parent=43 // pred_region
          %s2107 = sand.u32 %s125, 1
          %s2108 = scalar_lea.sflag [#allocation3], %s2107
          %s2109 = sand.u32 %s125, 1
          %s2110 = smul.addr %s2109, 256
          %s2111 = scalar_lea.vmem [#allocation2], %s2110
          %2112 = dma.done %s2108, 4096
        $region48: #{tpu_custom_call.1} parent=43 // pred_fallthru
          _
        // Predicated region
        $region49: #{tpu_custom_call.1} parent=43 // pred_check
          %p2113 = pneg %p168
        $region50: #{tpu_custom_call.1} parent=43 // pred_check_branch
          %2115 = sbr.rel (%p2113) target = $region52
        $region51: #{tpu_custom_call.1} parent=43 // pred_region
          %s2116 = sand.u32 %s153, 1
          %s2117 = scalar_lea.sflag [#allocation5], %s2116
          %s2118 = sand.u32 %s153, 1
          %s2119 = smul.addr %s2118, 256
          %s2120 = scalar_lea.vmem [#allocation4], %s2119
          %2121 = dma.done %s2117, 4096
        $region52: #{tpu_custom_call.1} parent=43 // pred_fallthru
          _
      $region44: #{tpu_custom_call.1} parent=5 // pred_fallthru
        _
    $region6: #{tpu_custom_call.1} parent=1 // loop_footer
      %s21 = sadd.s32 1, %s17
    $region7: #{tpu_custom_call.1} parent=1 // loop_footer_branch
      %16 = sbr.rel target = $region3
    $region8: #{tpu_custom_call.1} parent=1 // loop_exit
      _
    %2122 = vsyncpa [#allocation3], 1
    %s2123 = scalar_lea.sflag [#allocation3], 1
    %2124 = vsyncpa %s2123, 1
    %2125 = vsyncpa [#allocation5], 1
    %s2126 = scalar_lea.sflag [#allocation5], 1
    %2127 = vsyncpa %s2126, 1

</llo_original>
